<compile_context>
chip_gen: v7x
topology: tpu7x:2x2x1
jax: 0.10.0
libtpu: 0.0.40
codegen_flags: <defaults>
</compile_context>

<pallas_src>
import math
import jax
import jax.numpy as jnp
from jax.experimental import pallas as pl
from jax.experimental.pallas import tpu as pltpu


# ---------------------------------------------------------------------------
# Config (module defaults except flattened input size, shrunk for the demo).
# ---------------------------------------------------------------------------
NUM_COORDINATES = 3
NUM_NODES = 40
OUTPUT_SIZE = 32                       # previous_predictions_mlp_output_size
FLATTENED_INPUT_SIZE = 512             # module default 27000; small here
NEURONS = (128, 64, 32)
FINAL_OUT = NUM_NODES * NUM_COORDINATES  # 120


# ---------------------------------------------------------------------------
# Kernel: grid = (batch_tiles, k_tiles).  Layer-1 is K-tiled into an f32 VMEM
# accumulator; layers 2-4 (tiny) run once per batch tile on the last K step.
# ---------------------------------------------------------------------------
def _combination_mlp_kernel(prev_ref, flat_ref,
                            w1p_ref, w1f_ref, b1_ref,
                            w2_ref, b2_ref,
                            w3_ref, b3_ref,
                            w4_ref, b4_ref,
                            out_ref, acc_ref):
    k = pl.program_id(1)

    # First K step: seed the layer-1 accumulator with the "previous
    # predictions" half of the folded concat-matmul plus the bias.
    @pl.when(k == 0)
    def _():
        acc_ref[...] = (
            jnp.dot(prev_ref[...], w1p_ref[...],
                    preferred_element_type=jnp.float32)
            + b1_ref[...])

    # Every K step: stream one tile of the flattened CNN features (bf16)
    # through layer 1, accumulating in f32.
    acc_ref[...] += jnp.dot(flat_ref[...], w1f_ref[...],
                            preferred_element_type=jnp.float32)

    # Last K step: ReLU + layers 2-4 (f32) + lane-dense (tb, 128) store.
    @pl.when(k == pl.num_programs(1) - 1)
    def _():
        h = jnp.maximum(acc_ref[...], 0.0)
        h = jnp.maximum(
            jnp.dot(h, w2_ref[...], preferred_element_type=jnp.float32)
            + b2_ref[...], 0.0)
        h = jnp.maximum(
            jnp.dot(h, w3_ref[...], preferred_element_type=jnp.float32)
            + b3_ref[...], 0.0)
        out_ref[...] = (
            jnp.dot(h, w4_ref[...], preferred_element_type=jnp.float32)
            + b4_ref[...]).astype(out_ref.dtype)


def combination_mlp_forward(previous_predictions, cnn_attention_output, params,
                            *, batch_tile=128, k_tile=256,
                            compute_dtype=jnp.bfloat16, core_parallel=False):
    """previous_predictions: (B, OUTPUT_SIZE)
       cnn_attention_output: any shape flattening to (B, flattened_input_size)
       returns (B, NUM_NODES, NUM_COORDINATES) float32
    """
    (w1p, w1f, b1), (w2, b2), (w3, b3), (w4, b4) = params

    prev = previous_predictions.astype(jnp.float32)
    B = prev.shape[0]
    flat = cnn_attention_output.reshape(B, -1)
    K = flat.shape[1]
    assert w1f.shape[0] == K and w1p.shape[0] == prev.shape[1]

    n1 = w1f.shape[1]
    n_out = w4.shape[1]

    # --- lane-dense output: pad final layer to a multiple of 128 columns ----
    out_pad = (-n_out) % 128
    n_out_p = n_out + out_pad
    w4p = jnp.pad(w4.astype(jnp.float32), ((0, 0), (0, out_pad)))
    b4p = jnp.pad(b4.astype(jnp.float32), ((0, 0), (0, out_pad)))

    # --- batch tiling (pad ragged batch, slice afterwards) ------------------
    tb = batch_tile
    assert tb % 8 == 0, "batch_tile must be a multiple of 8 (sublanes)"
    num_bt = (B + tb - 1) // tb
    B_pad = num_bt * tb
    if B_pad != B:
        prev = jnp.pad(prev, ((0, B_pad - B), (0, 0)))
        flat = jnp.pad(flat, ((0, B_pad - B), (0, 0)))

    # --- K tiling of the flattened dim (zero-pad is exact) ------------------
    tk = k_tile
    assert tk % 128 == 0, "k_tile must be a multiple of 128 (lanes)"
    num_kt = (K + tk - 1) // tk
    K_pad = num_kt * tk
    flat_c = flat.astype(compute_dtype)
    w1f_c = w1f.astype(compute_dtype)
    if K_pad != K:
        flat_c = jnp.pad(flat_c, ((0, 0), (0, K_pad - K)))
        w1f_c = jnp.pad(w1f_c, ((0, K_pad - K), (0, 0)))

    w1p_c = w1p.astype(jnp.float32)
    b1_c = b1.astype(jnp.float32)
    w2_c = w2.astype(jnp.float32)
    b2_c = b2.astype(jnp.float32)
    w3_c = w3.astype(jnp.float32)
    b3_c = b3.astype(jnp.float32)

    def const_spec(arr):
        # Grid-invariant (small) operand: always block (0, 0).
        return pl.BlockSpec(arr.shape, lambda i, k: (0, 0))

    batch_sem = pltpu.CORE_PARALLEL if core_parallel else pltpu.PARALLEL

    out2d = pl.pallas_call(
        _combination_mlp_kernel,
        out_shape=jax.ShapeDtypeStruct((B_pad, n_out_p), jnp.float32),
        grid_spec=pltpu.PrefetchScalarGridSpec(
            num_scalar_prefetch=0,
            grid=(num_bt, num_kt),
            in_specs=[
                pl.BlockSpec((tb, prev.shape[1]), lambda i, k: (i, 0)),  # prev
                pl.BlockSpec((tb, tk), lambda i, k: (i, k)),             # flat
                const_spec(w1p_c),
                pl.BlockSpec((tk, n1), lambda i, k: (k, 0)),             # W1_flat
                const_spec(b1_c),
                const_spec(w2_c), const_spec(b2_c),
                const_spec(w3_c), const_spec(b3_c),
                const_spec(w4p), const_spec(b4p),
            ],
            out_specs=pl.BlockSpec((tb, n_out_p), lambda i, k: (i, 0)),
            scratch_shapes=[pltpu.VMEM((tb, n1), jnp.float32)],
        ),
        compiler_params=pltpu.CompilerParams(
            dimension_semantics=(batch_sem, pltpu.ARBITRARY)),
    )(prev, flat_c, w1p_c, w1f_c, b1_c, w2_c, b2_c, w3_c, b3_c, w4p, b4p)

    out2d = out2d[:B, :n_out]
    return out2d.reshape(B, NUM_NODES, NUM_COORDINATES)


# ---------------------------------------------------------------------------
# Deterministic parameter init (matches PyTorch nn.Linear default:
# uniform(-1/sqrt(fan_in), 1/sqrt(fan_in)) for both weight and bias).
# Weights stored (in_features, out_features); biases stored (1, out_features).
# ---------------------------------------------------------------------------
def init_params(key):
    dims_in = (OUTPUT_SIZE + FLATTENED_INPUT_SIZE, NEURONS[0], NEURONS[1], NEURONS[2])
    dims_out = (NEURONS[0], NEURONS[1], NEURONS[2], FINAL_OUT)
    keys = jax.random.split(key, 8)
    params = []
    for li, (fan_in, fan_out) in enumerate(zip(dims_in, dims_out)):
        bound = 1.0 / math.sqrt(fan_in)
        w = jax.random.uniform(keys[2 * li], (fan_in, fan_out),
                               minval=-bound, maxval=bound, dtype=jnp.float32)
        b = jax.random.uniform(keys[2 * li + 1], (1, fan_out),
                               minval=-bound, maxval=bound, dtype=jnp.float32)
        params.append((w, b))

    # Split layer-1 weight for the folded concat.
    w1, b1 = params[0]
    w1p = w1[:OUTPUT_SIZE, :]
    w1f = w1[OUTPUT_SIZE:, :]
    return ((w1p, w1f, b1), params[1], params[2], params[3])


def reference_forward(previous_predictions, cnn_attention_output, params,
                      *, compute_dtype=jnp.float32):
    """Pure-JAX reference (mirrors the PyTorch forward).  compute_dtype
    optionally mimics the kernel's bf16 layer-1 matmul inputs."""
    (w1p, w1f, b1), (w2, b2), (w3, b3), (w4, b4) = params
    B = previous_predictions.shape[0]
    flat = cnn_attention_output.reshape(B, -1)
    prev = previous_predictions.astype(jnp.float32)
    h = (jnp.dot(prev, w1p, preferred_element_type=jnp.float32)
         + jnp.dot(flat.astype(compute_dtype), w1f.astype(compute_dtype),
                   preferred_element_type=jnp.float32)
         + b1)
    h = jax.nn.relu(h)
    h = jax.nn.relu(h @ w2 + b2)
    h = jax.nn.relu(h @ w3 + b3)
    out = h @ w4 + b4
    return out.reshape(B, NUM_NODES, NUM_COORDINATES)


if __name__ == "__main__":
    key = jax.random.PRNGKey(0)
    k_param, k_prev, k_cnn = jax.random.split(key, 3)

    # B deliberately NOT a multiple of the batch tile -> exercises pad/slice.
    B = 200
    params = init_params(k_param)

    previous_predictions = jax.random.normal(k_prev, (B, OUTPUT_SIZE), jnp.float32)
    # cnn attention output, e.g. (B, C=8, H=8, W=8) NCHW -> flattens to 512
    cnn_attention_output = jax.random.normal(k_cnn, (B, 8, 8, 8), jnp.float32)

    out = combination_mlp_forward(previous_predictions, cnn_attention_output, params,
                                  batch_tile=128, k_tile=256,
                                  compute_dtype=jnp.bfloat16)
    out = jax.block_until_ready(out)
    assert out.shape == (B, NUM_NODES, NUM_COORDINATES)

    # Tight check vs. a reference with the same bf16 layer-1 matmul inputs.
    ref_bf16 = reference_forward(previous_predictions, cnn_attention_output,
                                 params, compute_dtype=jnp.bfloat16)
    assert jnp.allclose(out, ref_bf16, atol=1e-3, rtol=1e-3), \
        "mismatch vs matched-precision reference"

    # Loose check vs. the pure-f32 reference (bf16 layer-1 drift only).
    ref_f32 = reference_forward(previous_predictions, cnn_attention_output,
                                params, compute_dtype=jnp.float32)
    assert jnp.allclose(out, ref_f32, atol=5e-2, rtol=5e-2), \
        "mismatch vs f32 reference"

    print("KERNEL_OK")
</pallas_src>

<mosaic_0001>
module attributes {stable_mosaic.version = 11 : i64} {
  func.func @_combination_mlp_kernel(%arg0: i32, %arg1: i32, %arg2: memref<128x32xf32, #tpu.memory_space<vmem>>, %arg3: memref<128x256xbf16, #tpu.memory_space<vmem>>, %arg4: memref<32x128xf32, #tpu.memory_space<vmem>>, %arg5: memref<256x128xbf16, #tpu.memory_space<vmem>>, %arg6: memref<1x128xf32, #tpu.memory_space<vmem>>, %arg7: memref<128x64xf32, #tpu.memory_space<vmem>>, %arg8: memref<1x64xf32, #tpu.memory_space<vmem>>, %arg9: memref<64x32xf32, #tpu.memory_space<vmem>>, %arg10: memref<1x32xf32, #tpu.memory_space<vmem>>, %arg11: memref<32x128xf32, #tpu.memory_space<vmem>>, %arg12: memref<1x128xf32, #tpu.memory_space<vmem>>, %arg13: memref<128x128xf32, #tpu.memory_space<vmem>>, %arg14: memref<128x128xf32, #tpu.memory_space<vmem>>) attributes {dimension_semantics = [#tpu.dimension_semantics<parallel>, #tpu.dimension_semantics<arbitrary>], iteration_bounds = array<i64: 2, 2>, scalar_prefetch = 0 : i64, scratch_operands = 1 : i64, tpu.core_type = #tpu.core_type<tc>, window_params = [{transform_indices = @transform_0, window_bounds = array<i64: 128, 32>}, {transform_indices = @transform_1, window_bounds = array<i64: 128, 256>}, {pipeline_mode = #tpu.pipeline_mode<synchronous>, transform_indices = @transform_2, window_bounds = array<i64: 32, 128>}, {transform_indices = @transform_3, window_bounds = array<i64: 256, 128>}, {pipeline_mode = #tpu.pipeline_mode<synchronous>, transform_indices = @transform_4, window_bounds = array<i64: 1, 128>}, {pipeline_mode = #tpu.pipeline_mode<synchronous>, transform_indices = @transform_5, window_bounds = array<i64: 128, 64>}, {pipeline_mode = #tpu.pipeline_mode<synchronous>, transform_indices = @transform_6, window_bounds = array<i64: 1, 64>}, {pipeline_mode = #tpu.pipeline_mode<synchronous>, transform_indices = @transform_7, window_bounds = array<i64: 64, 32>}, {pipeline_mode = #tpu.pipeline_mode<synchronous>, transform_indices = @transform_8, window_bounds = array<i64: 1, 32>}, {pipeline_mode = #tpu.pipeline_mode<synchronous>, transform_indices = @transform_9, window_bounds = array<i64: 32, 128>}, {pipeline_mode = #tpu.pipeline_mode<synchronous>, transform_indices = @transform_10, window_bounds = array<i64: 1, 128>}, {transform_indices = @transform_11, window_bounds = array<i64: 128, 128>}]} {
    %c0_i32 = arith.constant 0 : i32
    %0 = arith.cmpi eq, %arg1, %c0_i32 : i32
    %1 = arith.extui %0 : i1 to i32
    %c0_i32_0 = arith.constant 0 : i32
    %2 = arith.cmpi ne, %1, %c0_i32_0 : i32
    scf.if %2 {
      %c0_9 = arith.constant 0 : index
      %c0_10 = arith.constant 0 : index
      %12 = vector.load %arg2[%c0_9, %c0_10] : memref<128x32xf32, #tpu.memory_space<vmem>>, vector<128x32xf32>
      %c0_11 = arith.constant 0 : index
      %c0_12 = arith.constant 0 : index
      %13 = vector.load %arg4[%c0_11, %c0_12] : memref<32x128xf32, #tpu.memory_space<vmem>>, vector<32x128xf32>
      %cst_13 = arith.constant dense<0.000000e+00> : vector<128x128xf32>
      %14 = tpu.matmul %12, %13, %cst_13 {dimension_numbers = #tpu.dot_dimension_numbers<[1], [0], [0], [1], [0, 0, 1, 1], [], []>} : vector<128x32xf32>, vector<32x128xf32>, vector<128x128xf32> -> vector<128x128xf32>
      %c0_14 = arith.constant 0 : index
      %c0_15 = arith.constant 0 : index
      %15 = vector.load %arg6[%c0_14, %c0_15] : memref<1x128xf32, #tpu.memory_space<vmem>>, vector<1x128xf32>
      %16 = vector.broadcast %15 : vector<1x128xf32> to vector<128x128xf32>
      %17 = arith.addf %14, %16 : vector<128x128xf32>
      %c0_16 = arith.constant 0 : index
      %c0_17 = arith.constant 0 : index
      %18 = vector.load %arg14[%c0_16, %c0_17] : memref<128x128xf32, #tpu.memory_space<vmem>>, vector<128x128xf32>
      tpu.vector_store %arg14[%c0_16, %c0_17], %17 {strides = array<i32>} : memref<128x128xf32, #tpu.memory_space<vmem>>, vector<128x128xf32>,
    } else {
    }
    %c0 = arith.constant 0 : index
    %c0_1 = arith.constant 0 : index
    %3 = vector.load %arg14[%c0, %c0_1] : memref<128x128xf32, #tpu.memory_space<vmem>>, vector<128x128xf32>
    %c0_2 = arith.constant 0 : index
    %c0_3 = arith.constant 0 : index
    %4 = vector.load %arg3[%c0_2, %c0_3] : memref<128x256xbf16, #tpu.memory_space<vmem>>, vector<128x256xbf16>
    %c0_4 = arith.constant 0 : index
    %c0_5 = arith.constant 0 : index
    %5 = vector.load %arg5[%c0_4, %c0_5] : memref<256x128xbf16, #tpu.memory_space<vmem>>, vector<256x128xbf16>
    %cst = arith.constant dense<0.000000e+00> : vector<128x128xf32>
    %6 = tpu.matmul %4, %5, %cst {dimension_numbers = #tpu.dot_dimension_numbers<[1], [0], [0], [1], [0, 0, 1, 1], [], []>} : vector<128x256xbf16>, vector<256x128xbf16>, vector<128x128xf32> -> vector<128x128xf32>
    %7 = arith.addf %3, %6 : vector<128x128xf32>
    %c0_6 = arith.constant 0 : index
    %c0_7 = arith.constant 0 : index
    %8 = vector.load %arg14[%c0_6, %c0_7] : memref<128x128xf32, #tpu.memory_space<vmem>>, vector<128x128xf32>
    tpu.vector_store %arg14[%c0_6, %c0_7], %7 {strides = array<i32>} : memref<128x128xf32, #tpu.memory_space<vmem>>, vector<128x128xf32>,
    %c1_i32 = arith.constant 1 : i32
    %9 = arith.cmpi eq, %arg1, %c1_i32 : i32
    %10 = arith.extui %9 : i1 to i32
    %c0_i32_8 = arith.constant 0 : i32
    %11 = arith.cmpi ne, %10, %c0_i32_8 : i32
    scf.if %11 {
      %c0_9 = arith.constant 0 : index
      %c0_10 = arith.constant 0 : index
      %12 = vector.load %arg14[%c0_9, %c0_10] : memref<128x128xf32, #tpu.memory_space<vmem>>, vector<128x128xf32>
      %cst_11 = arith.constant 0.000000e+00 : f32
      %13 = vector.broadcast %cst_11 : f32 to vector<128x128xf32>
      %14 = arith.maximumf %12, %13 : vector<128x128xf32>
      %c0_12 = arith.constant 0 : index
      %c0_13 = arith.constant 0 : index
      %15 = vector.load %arg7[%c0_12, %c0_13] : memref<128x64xf32, #tpu.memory_space<vmem>>, vector<128x64xf32>
      %cst_14 = arith.constant dense<0.000000e+00> : vector<128x64xf32>
      %16 = tpu.matmul %14, %15, %cst_14 {dimension_numbers = #tpu.dot_dimension_numbers<[1], [0], [0], [1], [0, 0, 1, 1], [], []>} : vector<128x128xf32>, vector<128x64xf32>, vector<128x64xf32> -> vector<128x64xf32>
      %c0_15 = arith.constant 0 : index
      %c0_16 = arith.constant 0 : index
      %17 = vector.load %arg8[%c0_15, %c0_16] : memref<1x64xf32, #tpu.memory_space<vmem>>, vector<1x64xf32>
      %18 = vector.broadcast %17 : vector<1x64xf32> to vector<128x64xf32>
      %19 = arith.addf %16, %18 : vector<128x64xf32>
      %cst_17 = arith.constant 0.000000e+00 : f32
      %20 = vector.broadcast %cst_17 : f32 to vector<128x64xf32>
      %21 = arith.maximumf %19, %20 : vector<128x64xf32>
      %c0_18 = arith.constant 0 : index
      %c0_19 = arith.constant 0 : index
      %22 = vector.load %arg9[%c0_18, %c0_19] : memref<64x32xf32, #tpu.memory_space<vmem>>, vector<64x32xf32>
      %cst_20 = arith.constant dense<0.000000e+00> : vector<128x32xf32>
      %23 = tpu.matmul %21, %22, %cst_20 {dimension_numbers = #tpu.dot_dimension_numbers<[1], [0], [0], [1], [0, 0, 1, 1], [], []>} : vector<128x64xf32>, vector<64x32xf32>, vector<128x32xf32> -> vector<128x32xf32>
      %c0_21 = arith.constant 0 : index
      %c0_22 = arith.constant 0 : index
      %24 = vector.load %arg10[%c0_21, %c0_22] : memref<1x32xf32, #tpu.memory_space<vmem>>, vector<1x32xf32>
      %25 = vector.broadcast %24 : vector<1x32xf32> to vector<128x32xf32>
      %26 = arith.addf %23, %25 : vector<128x32xf32>
      %cst_23 = arith.constant 0.000000e+00 : f32
      %27 = vector.broadcast %cst_23 : f32 to vector<128x32xf32>
      %28 = arith.maximumf %26, %27 : vector<128x32xf32>
      %c0_24 = arith.constant 0 : index
      %c0_25 = arith.constant 0 : index
      %29 = vector.load %arg11[%c0_24, %c0_25] : memref<32x128xf32, #tpu.memory_space<vmem>>, vector<32x128xf32>
      %cst_26 = arith.constant dense<0.000000e+00> : vector<128x128xf32>
      %30 = tpu.matmul %28, %29, %cst_26 {dimension_numbers = #tpu.dot_dimension_numbers<[1], [0], [0], [1], [0, 0, 1, 1], [], []>} : vector<128x32xf32>, vector<32x128xf32>, vector<128x128xf32> -> vector<128x128xf32>
      %c0_27 = arith.constant 0 : index
      %c0_28 = arith.constant 0 : index
      %31 = vector.load %arg12[%c0_27, %c0_28] : memref<1x128xf32, #tpu.memory_space<vmem>>, vector<1x128xf32>
      %32 = vector.broadcast %31 : vector<1x128xf32> to vector<128x128xf32>
      %33 = arith.addf %30, %32 : vector<128x128xf32>
      %c0_29 = arith.constant 0 : index
      %c0_30 = arith.constant 0 : index
      %34 = vector.load %arg13[%c0_29, %c0_30] : memref<128x128xf32, #tpu.memory_space<vmem>>, vector<128x128xf32>
      tpu.vector_store %arg13[%c0_29, %c0_30], %33 {strides = array<i32>} : memref<128x128xf32, #tpu.memory_space<vmem>>, vector<128x128xf32>,
    } else {
    }
    return
  }
  func.func @transform_0(%arg0: i32, %arg1: i32) -> (i32, i32) {
    %c0_i32 = arith.constant 0 : i32
    %c0_i32_0 = arith.constant 0 : i32
    return %arg0, %c0_i32 : i32, i32
  }
  func.func @transform_1(%arg0: i32, %arg1: i32) -> (i32, i32) {
    %c0_i32 = arith.constant 0 : i32
    return %arg0, %arg1 : i32, i32
  }
  func.func @transform_2(%arg0: i32, %arg1: i32) -> (i32, i32) {
    %c0_i32 = arith.constant 0 : i32
    %c0_i32_0 = arith.constant 0 : i32
    %c0_i32_1 = arith.constant 0 : i32
    return %c0_i32, %c0_i32_0 : i32, i32
  }
  func.func @transform_3(%arg0: i32, %arg1: i32) -> (i32, i32) {
    %c0_i32 = arith.constant 0 : i32
    %c0_i32_0 = arith.constant 0 : i32
    return %arg1, %c0_i32 : i32, i32
  }
  func.func @transform_4(%arg0: i32, %arg1: i32) -> (i32, i32) {
    %c0_i32 = arith.constant 0 : i32
    %c0_i32_0 = arith.constant 0 : i32
    %c0_i32_1 = arith.constant 0 : i32
    return %c0_i32, %c0_i32_0 : i32, i32
  }
  func.func @transform_5(%arg0: i32, %arg1: i32) -> (i32, i32) {
    %c0_i32 = arith.constant 0 : i32
    %c0_i32_0 = arith.constant 0 : i32
    %c0_i32_1 = arith.constant 0 : i32
    return %c0_i32, %c0_i32_0 : i32, i32
  }
  func.func @transform_6(%arg0: i32, %arg1: i32) -> (i32, i32) {
    %c0_i32 = arith.constant 0 : i32
    %c0_i32_0 = arith.constant 0 : i32
    %c0_i32_1 = arith.constant 0 : i32
    return %c0_i32, %c0_i32_0 : i32, i32
  }
  func.func @transform_7(%arg0: i32, %arg1: i32) -> (i32, i32) {
    %c0_i32 = arith.constant 0 : i32
    %c0_i32_0 = arith.constant 0 : i32
    %c0_i32_1 = arith.constant 0 : i32
    return %c0_i32, %c0_i32_0 : i32, i32
  }
  func.func @transform_8(%arg0: i32, %arg1: i32) -> (i32, i32) {
    %c0_i32 = arith.constant 0 : i32
    %c0_i32_0 = arith.constant 0 : i32
    %c0_i32_1 = arith.constant 0 : i32
    return %c0_i32, %c0_i32_0 : i32, i32
  }
  func.func @transform_9(%arg0: i32, %arg1: i32) -> (i32, i32) {
    %c0_i32 = arith.constant 0 : i32
    %c0_i32_0 = arith.constant 0 : i32
    %c0_i32_1 = arith.constant 0 : i32
    return %c0_i32, %c0_i32_0 : i32, i32
  }
  func.func @transform_10(%arg0: i32, %arg1: i32) -> (i32, i32) {
    %c0_i32 = arith.constant 0 : i32
    %c0_i32_0 = arith.constant 0 : i32
    %c0_i32_1 = arith.constant 0 : i32
    return %c0_i32, %c0_i32_0 : i32, i32
  }
  func.func @transform_11(%arg0: i32, %arg1: i32) -> (i32, i32) {
    %c0_i32 = arith.constant 0 : i32
    %c0_i32_0 = arith.constant 0 : i32
    return %arg0, %c0_i32 : i32, i32
  }
}

</mosaic_0001>

<llo_original>
// kernel: tpu_custom_call.1
$region0: #{tpu_custom_call.1}
  #allocation0 [shape = 'u32[]', space=smem, size = 0x4, offset = 0x4, fixed_abs, tag = 'smem constant byte address 0x4 - core index']
  #allocation1 [shape = 'u32[144,128]{1,0:T(1,128)}', space=vmem, size = 0x12000, scoped, tag = 'internal scratch']
  #allocation2 [shape = 'f32[128,128]{1,0:T(8,128)}', space=vmem, size = 0x10000, scoped, tag = 'scratch operand']
  %s0 = inlined_call_operand.vmem [shape: f32[256,32], index: 0, kind: input, shape index: {}]
  %s1 = inlined_call_operand.vmem [shape: bf16[256,512], index: 1, kind: input, shape index: {}]
  %s2 = inlined_call_operand.vmem [shape: f32[32,128], index: 2, kind: input, shape index: {}]
  %s3 = inlined_call_operand.hbm [shape: bf16[512,128], index: 3, kind: input, shape index: {}]
  %s4 = inlined_call_operand.vmem [shape: f32[1,128], index: 4, kind: input, shape index: {}]
  %s5 = inlined_call_operand.vmem [shape: f32[128,64], index: 5, kind: input, shape index: {}]
  %s6 = inlined_call_operand.vmem [shape: f32[1,64], index: 6, kind: input, shape index: {}]
  %s7 = inlined_call_operand.vmem [shape: f32[64,32], index: 7, kind: input, shape index: {}]
  %s8 = inlined_call_operand.vmem [shape: f32[1,32], index: 8, kind: input, shape index: {}]
  %s9 = inlined_call_operand.hbm [shape: f32[32,128], index: 9, kind: input, shape index: {}]
  %s10 = inlined_call_operand.vmem [shape: f32[1,128], index: 10, kind: input, shape index: {}]
  %s11 = inlined_call_operand.hbm [shape: f32[256,128], index: 11, kind: output, shape index: {}]
  %s12 = sld [smem:[#allocation0]]
  $region131: #{tpu_custom_call.1} parent=0
    _
  %s14 = ssub.s32 1, %s12
  %s15 = scalar_select 0, %s14, %s12
  $region1: #{tpu_custom_call.1} parent=0
    #allocation3 [shape = 'u8[131072]{0}', space=vmem, size = 0x20000, scoped, tag = 'input window, operand 1']
    #allocation4 [shape = 'u8[131072]{0}', space=vmem, size = 0x20000, scoped, tag = 'input window, operand 3']
    #allocation5 [shape = 's32[2]{0}', space=sflag, size = 0x8, scoped, tag = 'scoped memory for tpu_custom_call.1']
    #allocation6 [shape = 's32[2]{0}', space=sflag, size = 0x8, scoped, tag = 'scoped memory for tpu_custom_call.1']
    #allocation7 [shape = 'u8[16384]{0}', space=vmem, size = 0x4000, scoped, tag = 'input window, operand 9, single buffered']
    #allocation8 [shape = 's32[1]{0}', space=sflag, size = 0x4, scoped, tag = 'scoped memory for tpu_custom_call.1']
    #allocation9 [shape = 'u8[131072]{0}', space=vmem, size = 0x20000, scoped, tag = 'output window, operand 0']
    %16 = vsyncpa [#allocation5], 0
    %s17 = scalar_lea.sflag [#allocation5], 1
    %18 = vsyncpa %s17, 0
    %19 = vsyncpa [#allocation8], 0
    %20 = vsyncpa [#allocation6], 0
    %s21 = scalar_lea.sflag [#allocation6], 1
    %22 = vsyncpa %s21, 0
    loop: start=0, step=1, limit=6
    $region2: #{tpu_custom_call.1} parent=1 // loop_pre_header
      _
    $region3: #{tpu_custom_call.1} parent=1 // loop_header
      %s24 = sphi 0, %s28
      %p25 = scmp.ge.s32.totalorder %s24, 6
      %s31 = sphi 0, %s43
      %s32 = sphi 0, %s39
      %s33 = sphi 0, %s31
      %s34 = sphi 0, %s32
      %s35 = sphi 0, %s33
      %s36 = sphi 0, %s34
      %s46 = sphi 0, %s48
      %s49 = sphi 0, %s46
      %s50 = sphi 0, %s49
      %s66 = sphi 0, %s50
      %s74 = sphi 0, %s76
      %s77 = sphi 0, %s74
      %s78 = sphi 0, %s77
      %s94 = sphi 0, %s78
      %s98 = sphi 0, %s98
      %s100 = sphi 0, %s98
      %s101 = sphi 0, %s100
      %s115 = sphi 0, %s101
      %s121 = sphi 0, %s123
      %s124 = sphi 0, %s121
      %s125 = sphi 0, %s124
      %s141 = sphi 0, %s125
      %s145 = sphi 0, %s145
      %s147 = sphi 0, %s145
      %s148 = sphi 0, %s147
      %s162 = sphi 0, %s148
      %s166 = sphi 0, %s166
      %s168 = sphi 0, %s166
      %s169 = sphi 0, %s168
      %s183 = sphi 0, %s169
      %s187 = sphi 0, %s187
      %s189 = sphi 0, %s187
      %s190 = sphi 0, %s189
      %s204 = sphi 0, %s190
      %s208 = sphi 0, %s208
      %s210 = sphi 0, %s208
      %s211 = sphi 0, %s210
      %s225 = sphi 0, %s211
      %s229 = sphi 0, %s229
      %s231 = sphi 0, %s229
      %s232 = sphi 0, %s231
      %s246 = sphi 0, %s232
      %s250 = sphi 0, %s250
      %s252 = sphi 0, %s250
      %s253 = sphi 0, %s252
      %s267 = sphi 0, %s253
      %s271 = sphi 0, %s271
      %s273 = sphi 0, %s271
      %s274 = sphi 0, %s273
      %s288 = sphi 0, %s274
      %s294 = sphi 0, %s296
      %s297 = sphi 0, %s294
      %s298 = sphi 0, %s297
      %s314 = sphi 0, %s298
    $region4: #{tpu_custom_call.1} parent=1 // loop_header_branch
      %27 = sbr.rel (%p25) target = $region8
    $region5: #{tpu_custom_call.1} parent=1 // loop_body
      %s29 = ssub.s32 %s24, 1
      %s30 = ssub.s32 %s24, 2
      %s37 = sadd.s32 1, %s32
      %p38 = scmp.ge.s32.totalorder %s37, 2
      %s39 = scalar_select %p38, 0, %s37
      %s40 = sadd.s32 1, %s31
      %s41 = scalar_select %p38, %s40, %s31
      %p42 = scmp.ge.s32.totalorder %s41, 2
      %s43 = scalar_select %p42, 0, %s41
      %s44 = ssub.s32 %s31, %s43
      %p45 = scmp.eq.s32.totalorder %s44, 0
      %s47 = sadd.s32 %s46, 1
      %s48 = scalar_select %p45, %s46, %s47
      %p51 = pneg %p45
      %p52 = scmp.eq.s32.totalorder %s24, 3
      %p53 = por %p51, %p52
      %p54 = scmp.ne.s32.totalorder %s46, %s49
      %p55 = scmp.eq.s32.totalorder %s24, 0
      %p56 = por %p54, %p55
      %p57 = scmp.ne.s32.totalorder %s46, %s49
      %p58 = scmp.eq.s32.totalorder %s29, 3
      %p59 = por %p57, %p58
      %p60 = scmp.ne.s32.totalorder %s49, %s50
      %p61 = scmp.eq.s32.totalorder %s29, 0
      %p62 = por %p60, %p61
      %p63 = scmp.ne.s32.totalorder %s49, %s50
      %p64 = scmp.eq.s32.totalorder %s30, 3
      %p65 = por %p63, %p64
      %p67 = scmp.ne.s32.totalorder %s50, %s66
      %p68 = scmp.eq.s32.totalorder %s30, 0
      %p69 = por %p67, %p68
      %s70 = ssub.s32 %s31, %s43
      %s71 = ssub.s32 %s32, %s39
      %s72 = sor.u32 %s70, %s71
      %p73 = scmp.eq.s32.totalorder %s72, 0
      %s75 = sadd.s32 %s74, 1
      %s76 = scalar_select %p73, %s74, %s75
      %p79 = pneg %p73
      %p80 = scmp.eq.s32.totalorder %s24, 3
      %p81 = por %p79, %p80
      %p82 = scmp.ne.s32.totalorder %s74, %s77
      %p83 = scmp.eq.s32.totalorder %s24, 0
      %p84 = por %p82, %p83
      %p85 = scmp.ne.s32.totalorder %s74, %s77
      %p86 = scmp.eq.s32.totalorder %s29, 3
      %p87 = por %p85, %p86
      %p88 = scmp.ne.s32.totalorder %s77, %s78
      %p89 = scmp.eq.s32.totalorder %s29, 0
      %p90 = por %p88, %p89
      %p91 = scmp.ne.s32.totalorder %s77, %s78
      %p92 = scmp.eq.s32.totalorder %s30, 3
      %p93 = por %p91, %p92
      %p95 = scmp.ne.s32.totalorder %s78, %s94
      %p96 = scmp.eq.s32.totalorder %s30, 0
      %p97 = por %p95, %p96
      %s99 = sadd.s32 %s98, 1
      %p102 = scmp.eq.s32.totalorder %s24, 3
      %p103 = scmp.ne.s32.totalorder %s98, %s100
      %p104 = scmp.eq.s32.totalorder %s24, 0
      %p105 = por %p103, %p104
      %p106 = scmp.ne.s32.totalorder %s98, %s100
      %p107 = scmp.eq.s32.totalorder %s29, 3
      %p108 = por %p106, %p107
      %p109 = scmp.ne.s32.totalorder %s100, %s101
      %p110 = scmp.eq.s32.totalorder %s29, 0
      %p111 = por %p109, %p110
      %p112 = scmp.ne.s32.totalorder %s100, %s101
      %p113 = scmp.eq.s32.totalorder %s30, 3
      %p114 = por %p112, %p113
      %p116 = scmp.ne.s32.totalorder %s101, %s115
      %p117 = scmp.eq.s32.totalorder %s30, 0
      %p118 = por %p116, %p117
      %s119 = ssub.s32 %s32, %s39
      %p120 = scmp.eq.s32.totalorder %s119, 0
      %s122 = sadd.s32 %s121, 1
      %s123 = scalar_select %p120, %s121, %s122
      %p126 = pneg %p120
      %p127 = scmp.eq.s32.totalorder %s24, 3
      %p128 = por %p126, %p127
      %p129 = scmp.ne.s32.totalorder %s121, %s124
      %p130 = scmp.eq.s32.totalorder %s24, 0
      %p131 = por %p129, %p130
      %p132 = scmp.ne.s32.totalorder %s121, %s124
      %p133 = scmp.eq.s32.totalorder %s29, 3
      %p134 = por %p132, %p133
      %p135 = scmp.ne.s32.totalorder %s124, %s125
      %p136 = scmp.eq.s32.totalorder %s29, 0
      %p137 = por %p135, %p136
      %p138 = scmp.ne.s32.totalorder %s124, %s125
      %p139 = scmp.eq.s32.totalorder %s30, 3
      %p140 = por %p138, %p139
      %p142 = scmp.ne.s32.totalorder %s125, %s141
      %p143 = scmp.eq.s32.totalorder %s30, 0
      %p144 = por %p142, %p143
      %s146 = sadd.s32 %s145, 1
      %p149 = scmp.eq.s32.totalorder %s24, 3
      %p150 = scmp.ne.s32.totalorder %s145, %s147
      %p151 = scmp.eq.s32.totalorder %s24, 0
      %p152 = por %p150, %p151
      %p153 = scmp.ne.s32.totalorder %s145, %s147
      %p154 = scmp.eq.s32.totalorder %s29, 3
      %p155 = por %p153, %p154
      %p156 = scmp.ne.s32.totalorder %s147, %s148
      %p157 = scmp.eq.s32.totalorder %s29, 0
      %p158 = por %p156, %p157
      %p159 = scmp.ne.s32.totalorder %s147, %s148
      %p160 = scmp.eq.s32.totalorder %s30, 3
      %p161 = por %p159, %p160
      %p163 = scmp.ne.s32.totalorder %s148, %s162
      %p164 = scmp.eq.s32.totalorder %s30, 0
      %p165 = por %p163, %p164
      %s167 = sadd.s32 %s166, 1
      %p170 = scmp.eq.s32.totalorder %s24, 3
      %p171 = scmp.ne.s32.totalorder %s166, %s168
      %p172 = scmp.eq.s32.totalorder %s24, 0
      %p173 = por %p171, %p172
      %p174 = scmp.ne.s32.totalorder %s166, %s168
      %p175 = scmp.eq.s32.totalorder %s29, 3
      %p176 = por %p174, %p175
      %p177 = scmp.ne.s32.totalorder %s168, %s169
      %p178 = scmp.eq.s32.totalorder %s29, 0
      %p179 = por %p177, %p178
      %p180 = scmp.ne.s32.totalorder %s168, %s169
      %p181 = scmp.eq.s32.totalorder %s30, 3
      %p182 = por %p180, %p181
      %p184 = scmp.ne.s32.totalorder %s169, %s183
      %p185 = scmp.eq.s32.totalorder %s30, 0
      %p186 = por %p184, %p185
      %s188 = sadd.s32 %s187, 1
      %p191 = scmp.eq.s32.totalorder %s24, 3
      %p192 = scmp.ne.s32.totalorder %s187, %s189
      %p193 = scmp.eq.s32.totalorder %s24, 0
      %p194 = por %p192, %p193
      %p195 = scmp.ne.s32.totalorder %s187, %s189
      %p196 = scmp.eq.s32.totalorder %s29, 3
      %p197 = por %p195, %p196
      %p198 = scmp.ne.s32.totalorder %s189, %s190
      %p199 = scmp.eq.s32.totalorder %s29, 0
      %p200 = por %p198, %p199
      %p201 = scmp.ne.s32.totalorder %s189, %s190
      %p202 = scmp.eq.s32.totalorder %s30, 3
      %p203 = por %p201, %p202
      %p205 = scmp.ne.s32.totalorder %s190, %s204
      %p206 = scmp.eq.s32.totalorder %s30, 0
      %p207 = por %p205, %p206
      %s209 = sadd.s32 %s208, 1
      %p212 = scmp.eq.s32.totalorder %s24, 3
      %p213 = scmp.ne.s32.totalorder %s208, %s210
      %p214 = scmp.eq.s32.totalorder %s24, 0
      %p215 = por %p213, %p214
      %p216 = scmp.ne.s32.totalorder %s208, %s210
      %p217 = scmp.eq.s32.totalorder %s29, 3
      %p218 = por %p216, %p217
      %p219 = scmp.ne.s32.totalorder %s210, %s211
      %p220 = scmp.eq.s32.totalorder %s29, 0
      %p221 = por %p219, %p220
      %p222 = scmp.ne.s32.totalorder %s210, %s211
      %p223 = scmp.eq.s32.totalorder %s30, 3
      %p224 = por %p222, %p223
      %p226 = scmp.ne.s32.totalorder %s211, %s225
      %p227 = scmp.eq.s32.totalorder %s30, 0
      %p228 = por %p226, %p227
      %s230 = sadd.s32 %s229, 1
      %p233 = scmp.eq.s32.totalorder %s24, 3
      %p234 = scmp.ne.s32.totalorder %s229, %s231
      %p235 = scmp.eq.s32.totalorder %s24, 0
      %p236 = por %p234, %p235
      %p237 = scmp.ne.s32.totalorder %s229, %s231
      %p238 = scmp.eq.s32.totalorder %s29, 3
      %p239 = por %p237, %p238
      %p240 = scmp.ne.s32.totalorder %s231, %s232
      %p241 = scmp.eq.s32.totalorder %s29, 0
      %p242 = por %p240, %p241
      %p243 = scmp.ne.s32.totalorder %s231, %s232
      %p244 = scmp.eq.s32.totalorder %s30, 3
      %p245 = por %p243, %p244
      %p247 = scmp.ne.s32.totalorder %s232, %s246
      %p248 = scmp.eq.s32.totalorder %s30, 0
      %p249 = por %p247, %p248
      %s251 = sadd.s32 %s250, 1
      %p254 = scmp.eq.s32.totalorder %s24, 3
      %p255 = scmp.ne.s32.totalorder %s250, %s252
      %p256 = scmp.eq.s32.totalorder %s24, 0
      %p257 = por %p255, %p256
      %p258 = scmp.ne.s32.totalorder %s250, %s252
      %p259 = scmp.eq.s32.totalorder %s29, 3
      %p260 = por %p258, %p259
      %p261 = scmp.ne.s32.totalorder %s252, %s253
      %p262 = scmp.eq.s32.totalorder %s29, 0
      %p263 = por %p261, %p262
      %p264 = scmp.ne.s32.totalorder %s252, %s253
      %p265 = scmp.eq.s32.totalorder %s30, 3
      %p266 = por %p264, %p265
      %p268 = scmp.ne.s32.totalorder %s253, %s267
      %p269 = scmp.eq.s32.totalorder %s30, 0
      %p270 = por %p268, %p269
      %s272 = sadd.s32 %s271, 1
      %p275 = scmp.eq.s32.totalorder %s24, 3
      %p276 = scmp.ne.s32.totalorder %s271, %s273
      %p277 = scmp.eq.s32.totalorder %s24, 0
      %p278 = por %p276, %p277
      %p279 = scmp.ne.s32.totalorder %s271, %s273
      %p280 = scmp.eq.s32.totalorder %s29, 3
      %p281 = por %p279, %p280
      %p282 = scmp.ne.s32.totalorder %s273, %s274
      %p283 = scmp.eq.s32.totalorder %s29, 0
      %p284 = por %p282, %p283
      %p285 = scmp.ne.s32.totalorder %s273, %s274
      %p286 = scmp.eq.s32.totalorder %s30, 3
      %p287 = por %p285, %p286
      %p289 = scmp.ne.s32.totalorder %s274, %s288
      %p290 = scmp.eq.s32.totalorder %s30, 0
      %p291 = por %p289, %p290
      %s292 = ssub.s32 %s31, %s43
      %p293 = scmp.eq.s32.totalorder %s292, 0
      %s295 = sadd.s32 %s294, 1
      %s296 = scalar_select %p293, %s294, %s295
      %p299 = pneg %p293
      %p300 = scmp.eq.s32.totalorder %s24, 3
      %p301 = por %p299, %p300
      %p302 = scmp.ne.s32.totalorder %s294, %s297
      %p303 = scmp.eq.s32.totalorder %s24, 0
      %p304 = por %p302, %p303
      %p305 = scmp.ne.s32.totalorder %s294, %s297
      %p306 = scmp.eq.s32.totalorder %s29, 3
      %p307 = por %p305, %p306
      %p308 = scmp.ne.s32.totalorder %s297, %s298
      %p309 = scmp.eq.s32.totalorder %s29, 0
      %p310 = por %p308, %p309
      %p311 = scmp.ne.s32.totalorder %s297, %s298
      %p312 = scmp.eq.s32.totalorder %s30, 3
      %p313 = por %p311, %p312
      %p315 = scmp.ne.s32.totalorder %s298, %s314
      %p316 = scmp.eq.s32.totalorder %s30, 0
      %p317 = por %p315, %p316
      %p318 = scmp.le.s32.totalorder 1, %s24
      %p319 = scmp.lt.s32.totalorder %s24, 5
      %p320 = pnand %p318, %p319
      %p321 = pneg %p320
      // Predicated region
      $region9: #{tpu_custom_call.1} parent=5 // pred_check
        _
      $region10: #{tpu_custom_call.1} parent=5 // pred_check_branch
        %323 = sbr.rel (%p320) target = $region12
      $region11: #{tpu_custom_call.1} parent=5 // pred_region
        %s324 = ssub.s32 %s24, 1
        // Predicated region
        $region13: #{tpu_custom_call.1} parent=11 // pred_check
          %p325 = pneg %p111
        $region14: #{tpu_custom_call.1} parent=11 // pred_check_branch
          %327 = sbr.rel (%p325) target = $region16
        $region15: #{tpu_custom_call.1} parent=11 // pred_region
          _
        $region16: #{tpu_custom_call.1} parent=11 // pred_fallthru
          _
        // Predicated region
        $region17: #{tpu_custom_call.1} parent=11 // pred_check
          %p328 = pneg %p158
        $region18: #{tpu_custom_call.1} parent=11 // pred_check_branch
          %330 = sbr.rel (%p328) target = $region20
        $region19: #{tpu_custom_call.1} parent=11 // pred_region
          _
        $region20: #{tpu_custom_call.1} parent=11 // pred_fallthru
          _
        // Predicated region
        $region21: #{tpu_custom_call.1} parent=11 // pred_check
          %p331 = pneg %p179
        $region22: #{tpu_custom_call.1} parent=11 // pred_check_branch
          %333 = sbr.rel (%p331) target = $region24
        $region23: #{tpu_custom_call.1} parent=11 // pred_region
          _
        $region24: #{tpu_custom_call.1} parent=11 // pred_fallthru
          _
        // Predicated region
        $region25: #{tpu_custom_call.1} parent=11 // pred_check
          %p334 = pneg %p200
        $region26: #{tpu_custom_call.1} parent=11 // pred_check_branch
          %336 = sbr.rel (%p334) target = $region28
        $region27: #{tpu_custom_call.1} parent=11 // pred_region
          _
        $region28: #{tpu_custom_call.1} parent=11 // pred_fallthru
          _
        // Predicated region
        $region29: #{tpu_custom_call.1} parent=11 // pred_check
          %p337 = pneg %p221
        $region30: #{tpu_custom_call.1} parent=11 // pred_check_branch
          %339 = sbr.rel (%p337) target = $region32
        $region31: #{tpu_custom_call.1} parent=11 // pred_region
          _
        $region32: #{tpu_custom_call.1} parent=11 // pred_fallthru
          _
        // Predicated region
        $region33: #{tpu_custom_call.1} parent=11 // pred_check
          %p340 = pneg %p242
        $region34: #{tpu_custom_call.1} parent=11 // pred_check_branch
          %342 = sbr.rel (%p340) target = $region36
        $region35: #{tpu_custom_call.1} parent=11 // pred_region
          _
        $region36: #{tpu_custom_call.1} parent=11 // pred_fallthru
          _
        // Predicated region
        $region37: #{tpu_custom_call.1} parent=11 // pred_check
          %p343 = pneg %p263
        $region38: #{tpu_custom_call.1} parent=11 // pred_check_branch
          %345 = sbr.rel (%p343) target = $region40
        $region39: #{tpu_custom_call.1} parent=11 // pred_region
          %s347 = ssub.s32 512, 512
          %348 = vsyncadd [#allocation8], %s347
          %s349 = sshll.u32 [#allocation7], 4
          %s350 = int_to_ptr.vmem [resolvable:$true] %s349
          %355 = dma.hbm_to_vmem [thread:$0]  %s9, 512, %s350, [#allocation8], 128, 128, 8
        $region40: #{tpu_custom_call.1} parent=11 // pred_fallthru
          _
        // Predicated region
        $region41: #{tpu_custom_call.1} parent=11 // pred_check
          %p356 = pneg %p284
        $region42: #{tpu_custom_call.1} parent=11 // pred_check_branch
          %358 = sbr.rel (%p356) target = $region44
        $region43: #{tpu_custom_call.1} parent=11 // pred_region
          _
        $region44: #{tpu_custom_call.1} parent=11 // pred_fallthru
          _
      $region12: #{tpu_custom_call.1} parent=5 // pred_fallthru
        _
      %p359 = scmp.lt.s32.totalorder %s24, 4
      // Predicated region
      $region45: #{tpu_custom_call.1} parent=5 // pred_check
        %p360 = pneg %p359
      $region46: #{tpu_custom_call.1} parent=5 // pred_check_branch
        %362 = sbr.rel (%p360) target = $region48
      $region47: #{tpu_custom_call.1} parent=5 // pred_region
        // Predicated region
        $region49: #{tpu_custom_call.1} parent=47 // pred_check
          %p363 = pneg %p56
        $region50: #{tpu_custom_call.1} parent=47 // pred_check_branch
          %365 = sbr.rel (%p363) target = $region52
        $region51: #{tpu_custom_call.1} parent=47 // pred_region
          %s366 = smul.u32 16, %s31
          %p367 = scmp.lt.s32.totalorder %s366, 31
          %s368 = scalar_select %p367, %s366, 31
          %s369 = smul.addr %s368, 8
          %s370 = scalar_lea.vmem %s0, %s369
          %s371 = smul.u32 16, %s31
        $region52: #{tpu_custom_call.1} parent=47 // pred_fallthru
          _
        // Predicated region
        $region53: #{tpu_custom_call.1} parent=47 // pred_check
          %p372 = pneg %p84
        $region54: #{tpu_custom_call.1} parent=47 // pred_check_branch
          %374 = sbr.rel (%p372) target = $region56
        $region55: #{tpu_custom_call.1} parent=47 // pred_region
          %s375 = sand.u32 %s74, 1
          %s376 = sand.u32 %s74, 1
          %s377 = smul.addr %s376, 128
          %s378 = scalar_lea.vmem [#allocation3], %s377
          %s379 = smul.u32 16, %s31
          %s380 = smul.u32 2, %s32
          %s381 = smul.addr %s379, 4
          %s382 = sadd.s32 %s380, %s381
          %s383 = smul.addr %s382, 4
          %s384 = scalar_lea.vmem %s1, %s383
          // Predicated region
          $region57: #{tpu_custom_call.1} parent=55 // pred_check
            _
          $region58: #{tpu_custom_call.1} parent=55 // pred_check_branch
            %386 = sbr.rel (0) target = $region60
          $region59: #{tpu_custom_call.1} parent=55 // pred_region
            // Predicated region
            $region61: #{tpu_custom_call.1} parent=59 // pred_check
              _
            $region62: #{tpu_custom_call.1} parent=59 // pred_check_branch
              %388 = sbr.rel (0) target = $region64
            $region63: #{tpu_custom_call.1} parent=59 // pred_region
              // Predicated region
              $region76: #{tpu_custom_call.1} parent=63 // pred_check
                _
              $region77: #{tpu_custom_call.1} parent=63 // pred_check_branch
                %433 = sbr.rel (0) target = $region79
              $region78: #{tpu_custom_call.1} parent=63 // pred_region
                loop: start=0, step=1, limit=1
                $region80: #{tpu_custom_call.1} parent=78 // loop_pre_header
                  _
                $region81: #{tpu_custom_call.1} parent=78 // loop_header
                  %s435 = sphi 0, %s439
                  %p436 = scmp.ge.s32.totalorder %s435, 1
                  %s440 = sphi %s384, %s384
                  %s441 = sphi %s378, %s378
                $region82: #{tpu_custom_call.1} parent=78 // loop_header_branch
                  %438 = sbr.rel (%p436) target = $region86
                $region83: #{tpu_custom_call.1} parent=78 // loop_body
                  %v442 = vld [vmem:[%s440] sm:$0xff]
                  %443 = vst [vmem:[%s441] sm:$0xff] %v442
                  %v444 = vld [vmem:[%s440 + $0x10] sm:$0xff]
                  %445 = vst [vmem:[%s441 + $0x8] sm:$0xff] %v444
                  %v446 = vld [vmem:[%s440 + $0x20] sm:$0xff]
                  %447 = vst [vmem:[%s441 + $0x10] sm:$0xff] %v446
                  %v448 = vld [vmem:[%s440 + $0x30] sm:$0xff]
                  %449 = vst [vmem:[%s441 + $0x18] sm:$0xff] %v448
                  %v450 = vld [vmem:[%s440 + $0x40] sm:$0xff]
                  %451 = vst [vmem:[%s441 + $0x20] sm:$0xff] %v450
                  %v452 = vld [vmem:[%s440 + $0x50] sm:$0xff]
                  %453 = vst [vmem:[%s441 + $0x28] sm:$0xff] %v452
                  %v454 = vld [vmem:[%s440 + $0x60] sm:$0xff]
                  %455 = vst [vmem:[%s441 + $0x30] sm:$0xff] %v454
                  %v456 = vld [vmem:[%s440 + $0x70] sm:$0xff]
                  %457 = vst [vmem:[%s441 + $0x38] sm:$0xff] %v456
                  %v458 = vld [vmem:[%s440 + $0x80] sm:$0xff]
                  %459 = vst [vmem:[%s441 + $0x40] sm:$0xff] %v458
                  %v460 = vld [vmem:[%s440 + $0x90] sm:$0xff]
                  %461 = vst [vmem:[%s441 + $0x48] sm:$0xff] %v460
                  %v462 = vld [vmem:[%s440 + $0xa0] sm:$0xff]
                  %463 = vst [vmem:[%s441 + $0x50] sm:$0xff] %v462
                  %v464 = vld [vmem:[%s440 + $0xb0] sm:$0xff]
                  %465 = vst [vmem:[%s441 + $0x58] sm:$0xff] %v464
                  %v466 = vld [vmem:[%s440 + $0xc0] sm:$0xff]
                  %467 = vst [vmem:[%s441 + $0x60] sm:$0xff] %v466
                  %v468 = vld [vmem:[%s440 + $0xd0] sm:$0xff]
                  %469 = vst [vmem:[%s441 + $0x68] sm:$0xff] %v468
                  %v470 = vld [vmem:[%s440 + $0xe0] sm:$0xff]
                  %471 = vst [vmem:[%s441 + $0x70] sm:$0xff] %v470
                  %v472 = vld [vmem:[%s440 + $0xf0] sm:$0xff]
                  %473 = vst [vmem:[%s441 + $0x78] sm:$0xff] %v472
                $region84: #{tpu_custom_call.1} parent=78 // loop_footer
                  %s439 = sadd.s32 1, %s435
                $region85: #{tpu_custom_call.1} parent=78 // loop_footer_branch
                  %434 = sbr.rel target = $region81
                $region86: #{tpu_custom_call.1} parent=78 // loop_exit
                  _
              $region79: #{tpu_custom_call.1} parent=63 // pred_fallthru
                _
              // Predicated region
              $region87: #{tpu_custom_call.1} parent=63 // pred_check
                _
              $region88: #{tpu_custom_call.1} parent=63 // pred_check_branch
                %475 = sbr.rel target = $region90
              $region89: #{tpu_custom_call.1} parent=63 // pred_region
                _
              $region90: #{tpu_custom_call.1} parent=63 // pred_fallthru
                _
            $region64: #{tpu_custom_call.1} parent=59 // pred_fallthru
              _
            // Predicated region
            $region65: #{tpu_custom_call.1} parent=59 // pred_check
              _
            $region66: #{tpu_custom_call.1} parent=59 // pred_check_branch
              %390 = sbr.rel target = $region68
            $region67: #{tpu_custom_call.1} parent=59 // pred_region
              loop: start=0, step=1, limit=1
              $region69: #{tpu_custom_call.1} parent=67 // loop_pre_header
                _
              $region70: #{tpu_custom_call.1} parent=67 // loop_header
                %s393 = sphi 0, %s397
                %p394 = scmp.ge.s32.totalorder %s393, 1
                %s398 = sphi %s384, %s384
                %s399 = sphi %s378, %s378
              $region71: #{tpu_custom_call.1} parent=67 // loop_header_branch
                %396 = sbr.rel (%p394) target = $region75
              $region72: #{tpu_custom_call.1} parent=67 // loop_body
                %v400 = vld [vmem:[%s398] sm:$0xff]
                %401 = vst [vmem:[%s399] sm:$0xff] %v400
                %v402 = vld [vmem:[%s398 + $0x10] sm:$0xff]
                %403 = vst [vmem:[%s399 + $0x8] sm:$0xff] %v402
                %v404 = vld [vmem:[%s398 + $0x20] sm:$0xff]
                %405 = vst [vmem:[%s399 + $0x10] sm:$0xff] %v404
                %v406 = vld [vmem:[%s398 + $0x30] sm:$0xff]
                %407 = vst [vmem:[%s399 + $0x18] sm:$0xff] %v406
                %v408 = vld [vmem:[%s398 + $0x40] sm:$0xff]
                %409 = vst [vmem:[%s399 + $0x20] sm:$0xff] %v408
                %v410 = vld [vmem:[%s398 + $0x50] sm:$0xff]
                %411 = vst [vmem:[%s399 + $0x28] sm:$0xff] %v410
                %v412 = vld [vmem:[%s398 + $0x60] sm:$0xff]
                %413 = vst [vmem:[%s399 + $0x30] sm:$0xff] %v412
                %v414 = vld [vmem:[%s398 + $0x70] sm:$0xff]
                %415 = vst [vmem:[%s399 + $0x38] sm:$0xff] %v414
                %v416 = vld [vmem:[%s398 + $0x80] sm:$0xff]
                %417 = vst [vmem:[%s399 + $0x40] sm:$0xff] %v416
                %v418 = vld [vmem:[%s398 + $0x90] sm:$0xff]
                %419 = vst [vmem:[%s399 + $0x48] sm:$0xff] %v418
                %v420 = vld [vmem:[%s398 + $0xa0] sm:$0xff]
                %421 = vst [vmem:[%s399 + $0x50] sm:$0xff] %v420
                %v422 = vld [vmem:[%s398 + $0xb0] sm:$0xff]
                %423 = vst [vmem:[%s399 + $0x58] sm:$0xff] %v422
                %v424 = vld [vmem:[%s398 + $0xc0] sm:$0xff]
                %425 = vst [vmem:[%s399 + $0x60] sm:$0xff] %v424
                %v426 = vld [vmem:[%s398 + $0xd0] sm:$0xff]
                %427 = vst [vmem:[%s399 + $0x68] sm:$0xff] %v426
                %v428 = vld [vmem:[%s398 + $0xe0] sm:$0xff]
                %429 = vst [vmem:[%s399 + $0x70] sm:$0xff] %v428
                %v430 = vld [vmem:[%s398 + $0xf0] sm:$0xff]
                %431 = vst [vmem:[%s399 + $0x78] sm:$0xff] %v430
              $region73: #{tpu_custom_call.1} parent=67 // loop_footer
                %s397 = sadd.s32 1, %s393
              $region74: #{tpu_custom_call.1} parent=67 // loop_footer_branch
                %392 = sbr.rel target = $region70
              $region75: #{tpu_custom_call.1} parent=67 // loop_exit
                _
            $region68: #{tpu_custom_call.1} parent=59 // pred_fallthru
              _
          $region60: #{tpu_custom_call.1} parent=55 // pred_fallthru
            _
          %476 = vnop
        $region56: #{tpu_custom_call.1} parent=47 // pred_fallthru
          _
        // Predicated region
        $region91: #{tpu_custom_call.1} parent=47 // pred_check
          %p477 = pneg %p131
        $region92: #{tpu_custom_call.1} parent=47 // pred_check_branch
          %479 = sbr.rel (%p477) target = $region94
        $region93: #{tpu_custom_call.1} parent=47 // pred_region
          %s480 = sand.u32 %s121, 1
          %s481 = scalar_lea.sflag [#allocation5], %s480
          %s482 = sand.u32 %s121, 1
          %s483 = smul.addr %s482, 128
          %s484 = scalar_lea.vmem [#allocation4], %s483
          %s485 = smul.u32 32, %s32
          %s487 = ssub.s32 2048, 2048
          %488 = vsyncadd %s481, %s487
          %s489 = smul.addr %s485, 64
          %s490 = scalar_lea.hbm %s3, %s489
          %s491 = sshll.u32 %s484, 4
          %s492 = int_to_ptr.vmem [resolvable:$true] %s491
          %497 = dma.hbm_to_vmem [thread:$0]  %s490, 2048, %s492, %s481, 64, 64, 4
        $region94: #{tpu_custom_call.1} parent=47 // pred_fallthru
          _
      $region48: #{tpu_custom_call.1} parent=5 // pred_fallthru
        _
      %p498 = scmp.le.s32.totalorder 1, %s24
      %p499 = scmp.lt.s32.totalorder %s24, 5
      %p500 = pnand %p498, %p499
      %p501 = pneg %p500
      // Predicated region
      $region95: #{tpu_custom_call.1} parent=5 // pred_check
        _
      $region96: #{tpu_custom_call.1} parent=5 // pred_check_branch
        %503 = sbr.rel (%p500) target = $region98
      $region97: #{tpu_custom_call.1} parent=5 // pred_region
        %s504 = ssub.s32 %s24, 1
        %s505 = sand.u32 %s77, 1
        %s506 = sand.u32 %s77, 1
        %s507 = smul.addr %s506, 128
        %s508 = scalar_lea.vmem [#allocation3], %s507
        // Predicated region
        $region99: #{tpu_custom_call.1} parent=97 // pred_check
          %p509 = pneg %p90
        $region100: #{tpu_custom_call.1} parent=97 // pred_check_branch
          %511 = sbr.rel (%p509) target = $region102
        $region101: #{tpu_custom_call.1} parent=97 // pred_region
          _
        $region102: #{tpu_custom_call.1} parent=97 // pred_fallthru
          _
        %s512 = sand.u32 %s124, 1
        %s513 = scalar_lea.sflag [#allocation5], %s512
        %s514 = sand.u32 %s124, 1
        %s515 = smul.addr %s514, 128
        %s516 = scalar_lea.vmem [#allocation4], %s515
        // Predicated region
        $region103: #{tpu_custom_call.1} parent=97 // pred_check
          %p517 = pneg %p137
        $region104: #{tpu_custom_call.1} parent=97 // pred_check_branch
          %519 = sbr.rel (%p517) target = $region106
        $region105: #{tpu_custom_call.1} parent=97 // pred_region
          %520 = dma.done %s513, 2048
        $region106: #{tpu_custom_call.1} parent=97 // pred_fallthru
          _
        // Predicated region
        $region107: #{tpu_custom_call.1} parent=97 // pred_check
          %p521 = pneg %p263
        $region108: #{tpu_custom_call.1} parent=97 // pred_check_branch
          %523 = sbr.rel (%p521) target = $region110
        $region109: #{tpu_custom_call.1} parent=97 // pred_region
          %524 = dma.done [#allocation8], 512
        $region110: #{tpu_custom_call.1} parent=97 // pred_fallthru
          _
        %s525 = smul.u32 16, %s33
        %p526 = scmp.lt.s32.totalorder %s525, 31
        %s527 = scalar_select %p526, %s525, 31
        %s528 = smul.addr %s527, 8
        %s529 = scalar_lea.vmem %s0, %s528
        %p530 = pneg %p62
        %p531 = pneg %p59
        %s532 = sand.u32 %s77, 1
        %s533 = sand.u32 %s77, 1
        %s534 = smul.addr %s533, 128
        %s535 = scalar_lea.vmem [#allocation3], %s534
        %p536 = pneg %p90
        %p537 = pneg %p87
        %p538 = pneg %p111
        %p539 = pneg %p108
        %s540 = sand.u32 %s124, 1
        %s541 = scalar_lea.sflag [#allocation5], %s540
        %s542 = sand.u32 %s124, 1
        %s543 = smul.addr %s542, 128
        %s544 = scalar_lea.vmem [#allocation4], %s543
        %p545 = pneg %p137
        %p546 = pneg %p134
        %p547 = pneg %p158
        %p548 = pneg %p155
        %p549 = pneg %p179
        %p550 = pneg %p176
        %p551 = pneg %p200
        %p552 = pneg %p197
        %p553 = pneg %p221
        %p554 = pneg %p218
        %p555 = pneg %p242
        %p556 = pneg %p239
        %p557 = pneg %p263
        %p558 = pneg %p260
        %p559 = pneg %p284
        %p560 = pneg %p281
        %p561 = pneg %p310
        %p562 = pneg %p307
        %s563 = sand.u32 %s297, 1
        %s564 = scalar_lea.sflag [#allocation6], %s563
        %s565 = sand.u32 %s297, 1
        %s566 = smul.addr %s565, 128
        %s567 = scalar_lea.vmem [#allocation9], %s566
        %s568 = smul.u32 16, %s33
        %p569 = scmp.lt.s32.totalorder %s568, 31
        %s570 = scalar_select %p569, %s568, 31
        %s571 = smul.addr %s570, 8
        %s572 = scalar_lea.vmem %s0, %s571
        %s573 = smul.u32 16, %s33
        %s574 = smul.u32 16, %s33
        %s575 = smul.u32 2, %s34
        %s576 = smul.u32 32, %s34
        %s577 = smul.u32 16, %s33
        %p579 = scmp.eq.s32.totalorder %s34, 0
        // Predicated region
        $region111: #{tpu_custom_call.1} parent=97 // pred_check
          %p580 = pneg %p579
        $region112: #{tpu_custom_call.1} parent=97 // pred_check_branch
          %582 = sbr.rel (%p580) target = $region114
        $region113: #{tpu_custom_call.1} parent=97 // pred_region
          %v583 = vld [vmem:[%s572] sm:$0xff]
          %v584 = vld [vmem:[%s572 + $0x8] sm:$0xff]
          %v585 = vld [vmem:[%s572 + $0x10] sm:$0xff]
          %v586 = vld [vmem:[%s572 + $0x18] sm:$0xff]
          %v587 = vld [vmem:[%s572 + $0x20] sm:$0xff]
          %v588 = vld [vmem:[%s572 + $0x28] sm:$0xff]
          %v589 = vld [vmem:[%s572 + $0x30] sm:$0xff]
          %v590 = vld [vmem:[%s572 + $0x38] sm:$0xff]
          %v591 = vld [vmem:[%s572 + $0x40] sm:$0xff]
          %v592 = vld [vmem:[%s572 + $0x48] sm:$0xff]
          %v593 = vld [vmem:[%s572 + $0x50] sm:$0xff]
          %v594 = vld [vmem:[%s572 + $0x58] sm:$0xff]
          %v595 = vld [vmem:[%s572 + $0x60] sm:$0xff]
          %v596 = vld [vmem:[%s572 + $0x68] sm:$0xff]
          %v597 = vld [vmem:[%s572 + $0x70] sm:$0xff]
          %v598 = vld [vmem:[%s572 + $0x78] sm:$0xff]
          %v599 = vld [vmem:[%s2] sm:$0xff]
          %v600 = vld [vmem:[%s2 + $0x8] sm:$0xff]
          %v601 = vld [vmem:[%s2 + $0x10] sm:$0xff]
          %v602 = vld [vmem:[%s2 + $0x18] sm:$0xff]
          %v603 = vld [vmem:[%s4] sm:$0x1]
          %v605 = vlaneseq
          %v606 = vshrl.u32 %v605, 7
          %v607 = vsub.s32 0, %v606
          %v608 = vrot.slane %v603, %v607
          %vm610 = vcmask 261120
          %v612 = vsel %vm610, %v583, 0
          %v615 = vsel %vm610, %v584, 0
          %v618 = vsel %vm610, %v585, 0
          %v621 = vsel %vm610, %v586, 0
          %v624 = vsel %vm610, %v587, 0
          %v627 = vsel %vm610, %v588, 0
          %v630 = vsel %vm610, %v589, 0
          %v633 = vsel %vm610, %v590, 0
          %v636 = vsel %vm610, %v591, 0
          %v639 = vsel %vm610, %v592, 0
          %v642 = vsel %vm610, %v593, 0
          %v645 = vsel %vm610, %v594, 0
          %v648 = vsel %vm610, %v595, 0
          %v651 = vsel %vm610, %v596, 0
          %v654 = vsel %vm610, %v597, 0
          %v657 = vsel %vm610, %v598, 0
          %659 = vmatprep.subr.mxu0 0.0
          %660 = vmatpush1.msra.mxu0 %v599
          %661 = vmatprep.subr.mxu0 0.0
          %662 = vmatpush1.msra.mxu0 %v600
          %663 = vmatprep.subr.mxu0 0.0
          %664 = vmatpush1.msra.mxu0 %v601
          %665 = vmatprep.subr.mxu0 0.0
          %666 = vmatpush1.msra.mxu0 %v602
          %667 = vmatprep.subr.mxu0 0.0
          %668 = vmatpush1.msra.mxu0 0.0
          %669 = vmatprep.subr.mxu0 0.0
          %670 = vmatpush1.msra.mxu0 0.0
          %671 = vmatprep.subr.mxu0 0.0
          %672 = vmatpush1.msra.mxu0 0.0
          %673 = vmatprep.subr.mxu0 0.0
          %674 = vmatpush1.msra.mxu0 0.0
          %675 = vmatprep.subr.mxu0 0.0
          %676 = vmatpush1.msra.mxu0 0.0
          %677 = vmatprep.subr.mxu0 0.0
          %678 = vmatpush1.msra.mxu0 0.0
          %679 = vmatprep.subr.mxu0 0.0
          %680 = vmatpush1.msra.mxu0 0.0
          %681 = vmatprep.subr.mxu0 0.0
          %682 = vmatpush1.msra.mxu0 0.0
          %683 = vmatprep.subr.mxu0 0.0
          %684 = vmatpush1.msra.mxu0 0.0
          %685 = vmatprep.subr.mxu0 0.0
          %686 = vmatpush1.msra.mxu0 0.0
          %687 = vmatprep.subr.mxu0 0.0
          %688 = vmatpush1.msra.mxu0 0.0
          %689 = vmatprep.subr.mxu0 0.0
          %690 = vmatpush1.msra.mxu0 0.0
          %691 = vmatprep.subr.mxu0 0.0
          %692 = vmatpush1.msra.mxu0 0.0
          %693 = vmatprep.subr.mxu0 0.0
          %694 = vmatpush1.msra.mxu0 0.0
          %695 = vmatprep.subr.mxu0 0.0
          %696 = vmatpush1.msra.mxu0 0.0
          %697 = vmatprep.subr.mxu0 0.0
          %698 = vmatpush1.msra.mxu0 0.0
          %699 = vmatprep.subr.mxu0 0.0
          %700 = vmatpush1.msra.mxu0 0.0
          %701 = vmatprep.subr.mxu0 0.0
          %702 = vmatpush1.msra.mxu0 0.0
          %703 = vmatprep.subr.mxu0 0.0
          %704 = vmatpush1.msra.mxu0 0.0
          %705 = vmatprep.subr.mxu0 0.0
          %706 = vmatpush1.msra.mxu0 0.0
          %707 = vmatprep.subr.mxu0 0.0
          %708 = vmatpush1.msra.mxu0 0.0
          %709 = vmatprep.subr.mxu0 0.0
          %710 = vmatpush1.msra.mxu0 0.0
          %711 = vmatprep.subr.mxu0 0.0
          %712 = vmatpush1.msra.mxu0 0.0
          %713 = vmatprep.subr.mxu0 0.0
          %714 = vmatpush1.msra.mxu0 0.0
          %715 = vmatprep.subr.mxu0 0.0
          %716 = vmatpush1.msra.mxu0 0.0
          %717 = vmatprep.subr.mxu0 0.0
          %718 = vmatpush1.msra.mxu0 0.0
          %719 = vmatprep.subr.mxu0 0.0
          %720 = vmatpush1.msra.mxu0 0.0
          %721 = vmatprep.subr.mxu0 0.0
          %722 = vmatpush1.msra.mxu0 0.0
          %723 = vmatprep.mubr.f32.mxu0 0.0
          %724 = vmatmul.mubr.f32.gmra.mrb[0].mxu0 %v612
          %v725 = vpop.f32.mrb[0].mxu0
          %v726 = vadd.f32 %v608, %v725
          %v727 = vpop.f32.mrb[0].mxu0
          %728 = vmatprep.mubr.f32.mxu0 0.0
          %729 = vmatmul.mubr.f32.gmra.mrb[0].mxu0 %v615
          %v730 = vpop.f32.mrb[0].mxu0
          %v731 = vadd.f32 %v608, %v730
          %v732 = vpop.f32.mrb[0].mxu0
          %733 = vmatprep.mubr.f32.mxu0 0.0
          %734 = vmatmul.mubr.f32.gmra.mrb[0].mxu0 %v618
          %v735 = vpop.f32.mrb[0].mxu0
          %v736 = vadd.f32 %v608, %v735
          %v737 = vpop.f32.mrb[0].mxu0
          %738 = vmatprep.mubr.f32.mxu0 0.0
          %739 = vmatmul.mubr.f32.gmra.mrb[0].mxu0 %v621
          %v740 = vpop.f32.mrb[0].mxu0
          %v741 = vadd.f32 %v608, %v740
          %v742 = vpop.f32.mrb[0].mxu0
          %743 = vmatprep.mubr.f32.mxu0 0.0
          %744 = vmatmul.mubr.f32.gmra.mrb[0].mxu0 %v624
          %v745 = vpop.f32.mrb[0].mxu0
          %v746 = vadd.f32 %v608, %v745
          %v747 = vpop.f32.mrb[0].mxu0
          %748 = vmatprep.mubr.f32.mxu0 0.0
          %749 = vmatmul.mubr.f32.gmra.mrb[0].mxu0 %v627
          %v750 = vpop.f32.mrb[0].mxu0
          %v751 = vadd.f32 %v608, %v750
          %v752 = vpop.f32.mrb[0].mxu0
          %753 = vmatprep.mubr.f32.mxu0 0.0
          %754 = vmatmul.mubr.f32.gmra.mrb[0].mxu0 %v630
          %v755 = vpop.f32.mrb[0].mxu0
          %v756 = vadd.f32 %v608, %v755
          %v757 = vpop.f32.mrb[0].mxu0
          %758 = vmatprep.mubr.f32.mxu0 0.0
          %759 = vmatmul.mubr.f32.gmra.mrb[0].mxu0 %v633
          %v760 = vpop.f32.mrb[0].mxu0
          %v761 = vadd.f32 %v608, %v760
          %v762 = vpop.f32.mrb[0].mxu0
          %763 = vmatprep.mubr.f32.mxu0 0.0
          %764 = vmatmul.mubr.f32.gmra.mrb[0].mxu0 %v636
          %v765 = vpop.f32.mrb[0].mxu0
          %v766 = vadd.f32 %v608, %v765
          %v767 = vpop.f32.mrb[0].mxu0
          %768 = vmatprep.mubr.f32.mxu0 0.0
          %769 = vmatmul.mubr.f32.gmra.mrb[0].mxu0 %v639
          %v770 = vpop.f32.mrb[0].mxu0
          %v771 = vadd.f32 %v608, %v770
          %v772 = vpop.f32.mrb[0].mxu0
          %773 = vmatprep.mubr.f32.mxu0 0.0
          %774 = vmatmul.mubr.f32.gmra.mrb[0].mxu0 %v642
          %v775 = vpop.f32.mrb[0].mxu0
          %v776 = vadd.f32 %v608, %v775
          %v777 = vpop.f32.mrb[0].mxu0
          %778 = vmatprep.mubr.f32.mxu0 0.0
          %779 = vmatmul.mubr.f32.gmra.mrb[0].mxu0 %v645
          %v780 = vpop.f32.mrb[0].mxu0
          %v781 = vadd.f32 %v608, %v780
          %v782 = vpop.f32.mrb[0].mxu0
          %783 = vmatprep.mubr.f32.mxu0 0.0
          %784 = vmatmul.mubr.f32.gmra.mrb[0].mxu0 %v648
          %v785 = vpop.f32.mrb[0].mxu0
          %v786 = vadd.f32 %v608, %v785
          %v787 = vpop.f32.mrb[0].mxu0
          %788 = vmatprep.mubr.f32.mxu0 0.0
          %789 = vmatmul.mubr.f32.gmra.mrb[0].mxu0 %v651
          %v790 = vpop.f32.mrb[0].mxu0
          %v791 = vadd.f32 %v608, %v790
          %v792 = vpop.f32.mrb[0].mxu0
          %793 = vmatprep.mubr.f32.mxu0 0.0
          %794 = vmatmul.mubr.f32.gmra.mrb[0].mxu0 %v654
          %v795 = vpop.f32.mrb[0].mxu0
          %v796 = vadd.f32 %v608, %v795
          %v797 = vpop.f32.mrb[0].mxu0
          %798 = vmatprep.mubr.f32.mxu0 0.0
          %799 = vmatmul.mubr.f32.gmra.mrb[0].mxu0 %v657
          %v800 = vpop.f32.mrb[0].mxu0
          %v801 = vadd.f32 %v608, %v800
          %v802 = vpop.f32.mrb[0].mxu0
          %803 = vdwg.mxu0
          %804 = vst [vmem:[#allocation2] sm:$0xff] %v726
          %805 = vst [vmem:[#allocation2 + $0x8] sm:$0xff] %v731
          %806 = vst [vmem:[#allocation2 + $0x10] sm:$0xff] %v736
          %807 = vst [vmem:[#allocation2 + $0x18] sm:$0xff] %v741
          %808 = vst [vmem:[#allocation2 + $0x20] sm:$0xff] %v746
          %809 = vst [vmem:[#allocation2 + $0x28] sm:$0xff] %v751
          %810 = vst [vmem:[#allocation2 + $0x30] sm:$0xff] %v756
          %811 = vst [vmem:[#allocation2 + $0x38] sm:$0xff] %v761
          %812 = vst [vmem:[#allocation2 + $0x40] sm:$0xff] %v766
          %813 = vst [vmem:[#allocation2 + $0x48] sm:$0xff] %v771
          %814 = vst [vmem:[#allocation2 + $0x50] sm:$0xff] %v776
          %815 = vst [vmem:[#allocation2 + $0x58] sm:$0xff] %v781
          %816 = vst [vmem:[#allocation2 + $0x60] sm:$0xff] %v786
          %817 = vst [vmem:[#allocation2 + $0x68] sm:$0xff] %v791
          %818 = vst [vmem:[#allocation2 + $0x70] sm:$0xff] %v796
          %819 = vst [vmem:[#allocation2 + $0x78] sm:$0xff] %v801
        $region114: #{tpu_custom_call.1} parent=97 // pred_fallthru
          _
        %v820 = vld [vmem:[#allocation2] sm:$0xff]
        %v821 = vld [vmem:[#allocation2 + $0x8] sm:$0xff]
        %v822 = vld [vmem:[#allocation2 + $0x10] sm:$0xff]
        %v823 = vld [vmem:[#allocation2 + $0x18] sm:$0xff]
        %v824 = vld [vmem:[#allocation2 + $0x20] sm:$0xff]
        %v825 = vld [vmem:[#allocation2 + $0x28] sm:$0xff]
        %v826 = vld [vmem:[#allocation2 + $0x30] sm:$0xff]
        %v827 = vld [vmem:[#allocation2 + $0x38] sm:$0xff]
        %v828 = vld [vmem:[#allocation2 + $0x40] sm:$0xff]
        %v829 = vld [vmem:[#allocation2 + $0x48] sm:$0xff]
        %v830 = vld [vmem:[#allocation2 + $0x50] sm:$0xff]
        %v831 = vld [vmem:[#allocation2 + $0x58] sm:$0xff]
        %v832 = vld [vmem:[#allocation2 + $0x60] sm:$0xff]
        %v833 = vld [vmem:[#allocation2 + $0x68] sm:$0xff]
        %v834 = vld [vmem:[#allocation2 + $0x70] sm:$0xff]
        %v835 = vld [vmem:[#allocation2 + $0x78] sm:$0xff]
        %v836 = vld [vmem:[%s508] sm:$0xff]
        %v837 = vld [vmem:[%s508 + $0x8] sm:$0xff]
        %v838 = vld [vmem:[%s508 + $0x10] sm:$0xff]
        %v839 = vld [vmem:[%s508 + $0x18] sm:$0xff]
        %v840 = vld [vmem:[%s508 + $0x20] sm:$0xff]
        %v841 = vld [vmem:[%s508 + $0x28] sm:$0xff]
        %v842 = vld [vmem:[%s508 + $0x30] sm:$0xff]
        %v843 = vld [vmem:[%s508 + $0x38] sm:$0xff]
        %v844 = vld [vmem:[%s508 + $0x40] sm:$0xff]
        %v845 = vld [vmem:[%s508 + $0x48] sm:$0xff]
        %v846 = vld [vmem:[%s508 + $0x50] sm:$0xff]
        %v847 = vld [vmem:[%s508 + $0x58] sm:$0xff]
        %v848 = vld [vmem:[%s508 + $0x60] sm:$0xff]
        %v849 = vld [vmem:[%s508 + $0x68] sm:$0xff]
        %v850 = vld [vmem:[%s508 + $0x70] sm:$0xff]
        %v851 = vld [vmem:[%s508 + $0x78] sm:$0xff]
        %v852 = vld [vmem:[%s516] sm:$0xf]
        %v853 = vld [vmem:[%s516 + $0x4] sm:$0xf]
        %v854 = vld [vmem:[%s516 + $0x8] sm:$0xf]
        %v855 = vld [vmem:[%s516 + $0xc] sm:$0xf]
        %v856 = vld [vmem:[%s516 + $0x10] sm:$0xf]
        %v857 = vld [vmem:[%s516 + $0x14] sm:$0xf]
        %v858 = vld [vmem:[%s516 + $0x18] sm:$0xf]
        %v859 = vld [vmem:[%s516 + $0x1c] sm:$0xf]
        %v860 = vld [vmem:[%s516 + $0x20] sm:$0xf]
        %v861 = vld [vmem:[%s516 + $0x24] sm:$0xf]
        %v862 = vld [vmem:[%s516 + $0x28] sm:$0xf]
        %v863 = vld [vmem:[%s516 + $0x2c] sm:$0xf]
        %v864 = vld [vmem:[%s516 + $0x30] sm:$0xf]
        %v865 = vld [vmem:[%s516 + $0x34] sm:$0xf]
        %v866 = vld [vmem:[%s516 + $0x38] sm:$0xf]
        %v867 = vld [vmem:[%s516 + $0x3c] sm:$0xf]
        %v868 = vld [vmem:[%s516 + $0x40] sm:$0xf]
        %v869 = vld [vmem:[%s516 + $0x44] sm:$0xf]
        %v870 = vld [vmem:[%s516 + $0x48] sm:$0xf]
        %v871 = vld [vmem:[%s516 + $0x4c] sm:$0xf]
        %v872 = vld [vmem:[%s516 + $0x50] sm:$0xf]
        %v873 = vld [vmem:[%s516 + $0x54] sm:$0xf]
        %v874 = vld [vmem:[%s516 + $0x58] sm:$0xf]
        %v875 = vld [vmem:[%s516 + $0x5c] sm:$0xf]
        %v876 = vld [vmem:[%s516 + $0x60] sm:$0xf]
        %v877 = vld [vmem:[%s516 + $0x64] sm:$0xf]
        %v878 = vld [vmem:[%s516 + $0x68] sm:$0xf]
        %v879 = vld [vmem:[%s516 + $0x6c] sm:$0xf]
        %v880 = vld [vmem:[%s516 + $0x70] sm:$0xf]
        %v881 = vld [vmem:[%s516 + $0x74] sm:$0xf]
        %v882 = vld [vmem:[%s516 + $0x78] sm:$0xf]
        %v883 = vld [vmem:[%s516 + $0x7c] sm:$0xf]
        %v900 = vunpack.c.l.b16 %v836
        %v901 = vunpack.c.h.b16 %v836
        %v902 = vunpack.c.l.b16 %v837
        %v903 = vunpack.c.h.b16 %v837
        %v904 = vunpack.c.l.b16 %v838
        %v905 = vunpack.c.h.b16 %v838
        %v906 = vunpack.c.l.b16 %v839
        %v907 = vunpack.c.h.b16 %v839
        %v908 = vunpack.c.l.b16 %v840
        %v909 = vunpack.c.h.b16 %v840
        %v910 = vunpack.c.l.b16 %v841
        %v911 = vunpack.c.h.b16 %v841
        %v912 = vunpack.c.l.b16 %v842
        %v913 = vunpack.c.h.b16 %v842
        %v914 = vunpack.c.l.b16 %v843
        %v915 = vunpack.c.h.b16 %v843
        %v916 = vunpack.c.l.b16 %v844
        %v917 = vunpack.c.h.b16 %v844
        %v918 = vunpack.c.l.b16 %v845
        %v919 = vunpack.c.h.b16 %v845
        %v920 = vunpack.c.l.b16 %v846
        %v921 = vunpack.c.h.b16 %v846
        %v922 = vunpack.c.l.b16 %v847
        %v923 = vunpack.c.h.b16 %v847
        %v924 = vunpack.c.l.b16 %v848
        %v925 = vunpack.c.h.b16 %v848
        %v926 = vunpack.c.l.b16 %v849
        %v927 = vunpack.c.h.b16 %v849
        %v928 = vunpack.c.l.b16 %v850
        %v929 = vunpack.c.h.b16 %v850
        %v930 = vunpack.c.l.b16 %v851
        %v931 = vunpack.c.h.b16 %v851
        %v932 = vpack.c.b16 %v902, %v900
        %v933 = vpack.c.b16 %v903, %v901
        %v934 = vpack.c.b16 %v906, %v904
        %v935 = vpack.c.b16 %v907, %v905
        %v936 = vpack.c.b16 %v910, %v908
        %v937 = vpack.c.b16 %v911, %v909
        %v938 = vpack.c.b16 %v914, %v912
        %v939 = vpack.c.b16 %v915, %v913
        %v940 = vpack.c.b16 %v918, %v916
        %v941 = vpack.c.b16 %v919, %v917
        %v942 = vpack.c.b16 %v922, %v920
        %v943 = vpack.c.b16 %v923, %v921
        %v944 = vpack.c.b16 %v926, %v924
        %v945 = vpack.c.b16 %v927, %v925
        %v946 = vpack.c.b16 %v930, %v928
        %v947 = vpack.c.b16 %v931, %v929
        %v996 = vunpack.c.l.b16 %v852
        %v997 = vunpack.c.l.b16 %v853
        %v998 = vunpack.c.l.b16 %v854
        %v999 = vunpack.c.l.b16 %v855
        %v1000 = vunpack.c.l.b16 %v856
        %v1001 = vunpack.c.l.b16 %v857
        %v1002 = vunpack.c.l.b16 %v858
        %v1003 = vunpack.c.l.b16 %v859
        %v1004 = vunpack.c.l.b16 %v860
        %v1005 = vunpack.c.l.b16 %v861
        %v1006 = vunpack.c.l.b16 %v862
        %v1007 = vunpack.c.l.b16 %v863
        %v1008 = vunpack.c.l.b16 %v864
        %v1009 = vunpack.c.l.b16 %v865
        %v1010 = vunpack.c.l.b16 %v866
        %v1011 = vunpack.c.l.b16 %v867
        %v1012 = vunpack.c.l.b16 %v868
        %v1013 = vunpack.c.l.b16 %v869
        %v1014 = vunpack.c.l.b16 %v870
        %v1015 = vunpack.c.l.b16 %v871
        %v1016 = vunpack.c.l.b16 %v872
        %v1017 = vunpack.c.l.b16 %v873
        %v1018 = vunpack.c.l.b16 %v874
        %v1019 = vunpack.c.l.b16 %v875
        %v1020 = vunpack.c.l.b16 %v876
        %v1021 = vunpack.c.l.b16 %v877
        %v1022 = vunpack.c.l.b16 %v878
        %v1023 = vunpack.c.l.b16 %v879
        %v1024 = vunpack.c.l.b16 %v880
        %v1025 = vunpack.c.l.b16 %v881
        %v1026 = vunpack.c.l.b16 %v882
        %v1027 = vunpack.c.l.b16 %v883
        %v1028 = vpack.c.b16 %v997, %v996
        %v1029 = vpack.c.b16 %v999, %v998
        %v1030 = vpack.c.b16 %v1001, %v1000
        %v1031 = vpack.c.b16 %v1003, %v1002
        %v1032 = vpack.c.b16 %v1005, %v1004
        %v1033 = vpack.c.b16 %v1007, %v1006
        %v1034 = vpack.c.b16 %v1009, %v1008
        %v1035 = vpack.c.b16 %v1011, %v1010
        %v1036 = vpack.c.b16 %v1013, %v1012
        %v1037 = vpack.c.b16 %v1015, %v1014
        %v1038 = vpack.c.b16 %v1017, %v1016
        %v1039 = vpack.c.b16 %v1019, %v1018
        %v1040 = vpack.c.b16 %v1021, %v1020
        %v1041 = vpack.c.b16 %v1023, %v1022
        %v1042 = vpack.c.b16 %v1025, %v1024
        %v1043 = vpack.c.b16 %v1027, %v1026
        %1060 = vmatprep.subr.bf16.mxu0 0
        %1061 = vmatpush1.bf16.msra.mxu0 %v1028
        %1062 = vmatprep.subr.bf16.mxu0 0
        %1063 = vmatpush1.bf16.msra.mxu0 %v1029
        %1064 = vmatprep.subr.bf16.mxu0 0
        %1065 = vmatpush1.bf16.msra.mxu0 %v1030
        %1066 = vmatprep.subr.bf16.mxu0 0
        %1067 = vmatpush1.bf16.msra.mxu0 %v1031
        %1068 = vmatprep.subr.bf16.mxu0 0
        %1069 = vmatpush1.bf16.msra.mxu0 %v1032
        %1070 = vmatprep.subr.bf16.mxu0 0
        %1071 = vmatpush1.bf16.msra.mxu0 %v1033
        %1072 = vmatprep.subr.bf16.mxu0 0
        %1073 = vmatpush1.bf16.msra.mxu0 %v1034
        %1074 = vmatprep.subr.bf16.mxu0 0
        %1075 = vmatpush1.bf16.msra.mxu0 %v1035
        %1076 = vmatprep.subr.bf16.mxu0 0
        %1077 = vmatpush1.bf16.msra.mxu0 %v1036
        %1078 = vmatprep.subr.bf16.mxu0 0
        %1079 = vmatpush1.bf16.msra.mxu0 %v1037
        %1080 = vmatprep.subr.bf16.mxu0 0
        %1081 = vmatpush1.bf16.msra.mxu0 %v1038
        %1082 = vmatprep.subr.bf16.mxu0 0
        %1083 = vmatpush1.bf16.msra.mxu0 %v1039
        %1084 = vmatprep.subr.bf16.mxu0 0
        %1085 = vmatpush1.bf16.msra.mxu0 %v1040
        %1086 = vmatprep.subr.bf16.mxu0 0
        %1087 = vmatpush1.bf16.msra.mxu0 %v1041
        %1088 = vmatprep.subr.bf16.mxu0 0
        %1089 = vmatpush1.bf16.msra.mxu0 %v1042
        %1090 = vmatprep.subr.bf16.mxu0 0
        %1091 = vmatpush1.bf16.msra.mxu0 %v1043
        %1092 = vmatprep.mubr.bf16.mxu0 %v933
        %1093 = vmatmul.mubr.bf16.gmra.mrb[0].mxu0 %v932
        %v1094 = vpop.f32.mrb[0].mxu0
        %v1095 = vadd.f32 0.0, %v1094
        %v1096 = vpop.f32.mrb[0].mxu0
        %v1097 = vpop.f32.mrb[0].mxu0
        %v1098 = vadd.f32 0.0, %v1097
        %v1099 = vpop.f32.mrb[0].mxu0
        %1100 = vmatprep.mubr.bf16.mxu0 %v935
        %1101 = vmatmul.mubr.bf16.gmra.mrb[0].mxu0 %v934
        %v1102 = vpop.f32.mrb[0].mxu0
        %v1103 = vadd.f32 0.0, %v1102
        %v1104 = vpop.f32.mrb[0].mxu0
        %v1105 = vpop.f32.mrb[0].mxu0
        %v1106 = vadd.f32 0.0, %v1105
        %v1107 = vpop.f32.mrb[0].mxu0
        %1108 = vmatprep.mubr.bf16.mxu0 %v937
        %1109 = vmatmul.mubr.bf16.gmra.mrb[0].mxu0 %v936
        %v1110 = vpop.f32.mrb[0].mxu0
        %v1111 = vadd.f32 0.0, %v1110
        %v1112 = vpop.f32.mrb[0].mxu0
        %v1113 = vpop.f32.mrb[0].mxu0
        %v1114 = vadd.f32 0.0, %v1113
        %v1115 = vpop.f32.mrb[0].mxu0
        %1116 = vmatprep.mubr.bf16.mxu0 %v939
        %1117 = vmatmul.mubr.bf16.gmra.mrb[0].mxu0 %v938
        %v1118 = vpop.f32.mrb[0].mxu0
        %v1119 = vadd.f32 0.0, %v1118
        %v1120 = vpop.f32.mrb[0].mxu0
        %v1121 = vpop.f32.mrb[0].mxu0
        %v1122 = vadd.f32 0.0, %v1121
        %v1123 = vpop.f32.mrb[0].mxu0
        %1124 = vmatprep.mubr.bf16.mxu0 %v941
        %1125 = vmatmul.mubr.bf16.gmra.mrb[0].mxu0 %v940
        %v1126 = vpop.f32.mrb[0].mxu0
        %v1127 = vadd.f32 0.0, %v1126
        %v1128 = vpop.f32.mrb[0].mxu0
        %v1129 = vpop.f32.mrb[0].mxu0
        %v1130 = vadd.f32 0.0, %v1129
        %v1131 = vpop.f32.mrb[0].mxu0
        %1132 = vmatprep.mubr.bf16.mxu0 %v943
        %1133 = vmatmul.mubr.bf16.gmra.mrb[0].mxu0 %v942
        %v1134 = vpop.f32.mrb[0].mxu0
        %v1135 = vadd.f32 0.0, %v1134
        %v1136 = vpop.f32.mrb[0].mxu0
        %v1137 = vpop.f32.mrb[0].mxu0
        %v1138 = vadd.f32 0.0, %v1137
        %v1139 = vpop.f32.mrb[0].mxu0
        %1140 = vmatprep.mubr.bf16.mxu0 %v945
        %1141 = vmatmul.mubr.bf16.gmra.mrb[0].mxu0 %v944
        %v1142 = vpop.f32.mrb[0].mxu0
        %v1143 = vadd.f32 0.0, %v1142
        %v1144 = vpop.f32.mrb[0].mxu0
        %v1145 = vpop.f32.mrb[0].mxu0
        %v1146 = vadd.f32 0.0, %v1145
        %v1147 = vpop.f32.mrb[0].mxu0
        %1148 = vmatprep.mubr.bf16.mxu0 %v947
        %1149 = vmatmul.mubr.bf16.gmra.mrb[0].mxu0 %v946
        %v1150 = vpop.f32.mrb[0].mxu0
        %v1151 = vadd.f32 0.0, %v1150
        %v1152 = vpop.f32.mrb[0].mxu0
        %v1153 = vpop.f32.mrb[0].mxu0
        %v1154 = vadd.f32 0.0, %v1153
        %v1155 = vpop.f32.mrb[0].mxu0
        %1156 = vdwg.mxu0
        %v1157 = vadd.f32 %v820, %v1095
        %v1158 = vadd.f32 %v821, %v1098
        %v1159 = vadd.f32 %v822, %v1103
        %v1160 = vadd.f32 %v823, %v1106
        %v1161 = vadd.f32 %v824, %v1111
        %v1162 = vadd.f32 %v825, %v1114
        %v1163 = vadd.f32 %v826, %v1119
        %v1164 = vadd.f32 %v827, %v1122
        %v1165 = vadd.f32 %v828, %v1127
        %v1166 = vadd.f32 %v829, %v1130
        %v1167 = vadd.f32 %v830, %v1135
        %v1168 = vadd.f32 %v831, %v1138
        %v1169 = vadd.f32 %v832, %v1143
        %v1170 = vadd.f32 %v833, %v1146
        %v1171 = vadd.f32 %v834, %v1151
        %v1172 = vadd.f32 %v835, %v1154
        %1173 = vst [vmem:[#allocation2] sm:$0xff] %v1157
        %1174 = vst [vmem:[#allocation2 + $0x8] sm:$0xff] %v1158
        %1175 = vst [vmem:[#allocation2 + $0x10] sm:$0xff] %v1159
        %1176 = vst [vmem:[#allocation2 + $0x18] sm:$0xff] %v1160
        %1177 = vst [vmem:[#allocation2 + $0x20] sm:$0xff] %v1161
        %1178 = vst [vmem:[#allocation2 + $0x28] sm:$0xff] %v1162
        %1179 = vst [vmem:[#allocation2 + $0x30] sm:$0xff] %v1163
        %1180 = vst [vmem:[#allocation2 + $0x38] sm:$0xff] %v1164
        %1181 = vst [vmem:[#allocation2 + $0x40] sm:$0xff] %v1165
        %1182 = vst [vmem:[#allocation2 + $0x48] sm:$0xff] %v1166
        %1183 = vst [vmem:[#allocation2 + $0x50] sm:$0xff] %v1167
        %1184 = vst [vmem:[#allocation2 + $0x58] sm:$0xff] %v1168
        %1185 = vst [vmem:[#allocation2 + $0x60] sm:$0xff] %v1169
        %1186 = vst [vmem:[#allocation2 + $0x68] sm:$0xff] %v1170
        %1187 = vst [vmem:[#allocation2 + $0x70] sm:$0xff] %v1171
        %1188 = vst [vmem:[#allocation2 + $0x78] sm:$0xff] %v1172
        %p1189 = scmp.eq.s32.totalorder %s34, 1
        // Predicated region
        $region115: #{tpu_custom_call.1} parent=97 // pred_check
          %p1190 = pneg %p1189
        $region116: #{tpu_custom_call.1} parent=97 // pred_check_branch
          %1192 = sbr.rel (%p1190) target = $region118
        $region117: #{tpu_custom_call.1} parent=97 // pred_region
          %v1193 = vld [vmem:[#allocation2] sm:$0xff]
          %v1194 = vld [vmem:[#allocation2 + $0x8] sm:$0xff]
          %v1195 = vld [vmem:[#allocation2 + $0x10] sm:$0xff]
          %v1196 = vld [vmem:[#allocation2 + $0x18] sm:$0xff]
          %v1197 = vld [vmem:[#allocation2 + $0x20] sm:$0xff]
          %v1198 = vld [vmem:[#allocation2 + $0x28] sm:$0xff]
          %v1199 = vld [vmem:[#allocation2 + $0x30] sm:$0xff]
          %v1200 = vld [vmem:[#allocation2 + $0x38] sm:$0xff]
          %v1201 = vld [vmem:[#allocation2 + $0x40] sm:$0xff]
          %v1202 = vld [vmem:[#allocation2 + $0x48] sm:$0xff]
          %v1203 = vld [vmem:[#allocation2 + $0x50] sm:$0xff]
          %v1204 = vld [vmem:[#allocation2 + $0x58] sm:$0xff]
          %v1205 = vld [vmem:[#allocation2 + $0x60] sm:$0xff]
          %v1206 = vld [vmem:[#allocation2 + $0x68] sm:$0xff]
          %v1207 = vld [vmem:[#allocation2 + $0x70] sm:$0xff]
          %v1208 = vld [vmem:[#allocation2 + $0x78] sm:$0xff]
          %v1209 = vmax.f32 %v1193, 0.0
          %v1210 = vmax.f32 %v1194, 0.0
          %v1211 = vmax.f32 %v1195, 0.0
          %v1212 = vmax.f32 %v1196, 0.0
          %v1213 = vmax.f32 %v1197, 0.0
          %v1214 = vmax.f32 %v1198, 0.0
          %v1215 = vmax.f32 %v1199, 0.0
          %v1216 = vmax.f32 %v1200, 0.0
          %v1217 = vmax.f32 %v1201, 0.0
          %v1218 = vmax.f32 %v1202, 0.0
          %v1219 = vmax.f32 %v1203, 0.0
          %v1220 = vmax.f32 %v1204, 0.0
          %v1221 = vmax.f32 %v1205, 0.0
          %v1222 = vmax.f32 %v1206, 0.0
          %v1223 = vmax.f32 %v1207, 0.0
          %v1224 = vmax.f32 %v1208, 0.0
          %v1225 = vld [vmem:[%s5] sm:$0xff]
          %v1226 = vld [vmem:[%s5 + $0x8] sm:$0xff]
          %v1227 = vld [vmem:[%s5 + $0x10] sm:$0xff]
          %v1228 = vld [vmem:[%s5 + $0x18] sm:$0xff]
          %v1229 = vld [vmem:[%s5 + $0x20] sm:$0xff]
          %v1230 = vld [vmem:[%s5 + $0x28] sm:$0xff]
          %v1231 = vld [vmem:[%s5 + $0x30] sm:$0xff]
          %v1232 = vld [vmem:[%s5 + $0x38] sm:$0xff]
          %v1233 = vld [vmem:[%s5 + $0x40] sm:$0xff]
          %v1234 = vld [vmem:[%s5 + $0x48] sm:$0xff]
          %v1235 = vld [vmem:[%s5 + $0x50] sm:$0xff]
          %v1236 = vld [vmem:[%s5 + $0x58] sm:$0xff]
          %v1237 = vld [vmem:[%s5 + $0x60] sm:$0xff]
          %v1238 = vld [vmem:[%s5 + $0x68] sm:$0xff]
          %v1239 = vld [vmem:[%s5 + $0x70] sm:$0xff]
          %v1240 = vld [vmem:[%s5 + $0x78] sm:$0xff]
          %v1241 = vld [vmem:[%s6] sm:$0x1]
          %v1243 = vlaneseq
          %v1244 = vshrl.u32 %v1243, 7
          %v1245 = vsub.s32 0, %v1244
          %v1246 = vrot.slane %v1241, %v1245
          %1248 = vmatprep.subr.mxu0 0.0
          %1249 = vmatpush1.msra.mxu0 %v1225
          %1250 = vmatprep.subr.mxu0 0.0
          %1251 = vmatpush1.msra.mxu0 %v1226
          %1252 = vmatprep.subr.mxu0 0.0
          %1253 = vmatpush1.msra.mxu0 %v1227
          %1254 = vmatprep.subr.mxu0 0.0
          %1255 = vmatpush1.msra.mxu0 %v1228
          %1256 = vmatprep.subr.mxu0 0.0
          %1257 = vmatpush1.msra.mxu0 %v1229
          %1258 = vmatprep.subr.mxu0 0.0
          %1259 = vmatpush1.msra.mxu0 %v1230
          %1260 = vmatprep.subr.mxu0 0.0
          %1261 = vmatpush1.msra.mxu0 %v1231
          %1262 = vmatprep.subr.mxu0 0.0
          %1263 = vmatpush1.msra.mxu0 %v1232
          %1264 = vmatprep.subr.mxu0 0.0
          %1265 = vmatpush1.msra.mxu0 %v1233
          %1266 = vmatprep.subr.mxu0 0.0
          %1267 = vmatpush1.msra.mxu0 %v1234
          %1268 = vmatprep.subr.mxu0 0.0
          %1269 = vmatpush1.msra.mxu0 %v1235
          %1270 = vmatprep.subr.mxu0 0.0
          %1271 = vmatpush1.msra.mxu0 %v1236
          %1272 = vmatprep.subr.mxu0 0.0
          %1273 = vmatpush1.msra.mxu0 %v1237
          %1274 = vmatprep.subr.mxu0 0.0
          %1275 = vmatpush1.msra.mxu0 %v1238
          %1276 = vmatprep.subr.mxu0 0.0
          %1277 = vmatpush1.msra.mxu0 %v1239
          %1278 = vmatprep.subr.mxu0 0.0
          %1279 = vmatpush1.msra.mxu0 %v1240
          %1280 = vmatprep.subr.mxu0 0.0
          %1281 = vmatpush1.msra.mxu0 0.0
          %1282 = vmatprep.subr.mxu0 0.0
          %1283 = vmatpush1.msra.mxu0 0.0
          %1284 = vmatprep.subr.mxu0 0.0
          %1285 = vmatpush1.msra.mxu0 0.0
          %1286 = vmatprep.subr.mxu0 0.0
          %1287 = vmatpush1.msra.mxu0 0.0
          %1288 = vmatprep.subr.mxu0 0.0
          %1289 = vmatpush1.msra.mxu0 0.0
          %1290 = vmatprep.subr.mxu0 0.0
          %1291 = vmatpush1.msra.mxu0 0.0
          %1292 = vmatprep.subr.mxu0 0.0
          %1293 = vmatpush1.msra.mxu0 0.0
          %1294 = vmatprep.subr.mxu0 0.0
          %1295 = vmatpush1.msra.mxu0 0.0
          %1296 = vmatprep.subr.mxu0 0.0
          %1297 = vmatpush1.msra.mxu0 0.0
          %1298 = vmatprep.subr.mxu0 0.0
          %1299 = vmatpush1.msra.mxu0 0.0
          %1300 = vmatprep.subr.mxu0 0.0
          %1301 = vmatpush1.msra.mxu0 0.0
          %1302 = vmatprep.subr.mxu0 0.0
          %1303 = vmatpush1.msra.mxu0 0.0
          %1304 = vmatprep.subr.mxu0 0.0
          %1305 = vmatpush1.msra.mxu0 0.0
          %1306 = vmatprep.subr.mxu0 0.0
          %1307 = vmatpush1.msra.mxu0 0.0
          %1308 = vmatprep.subr.mxu0 0.0
          %1309 = vmatpush1.msra.mxu0 0.0
          %1310 = vmatprep.subr.mxu0 0.0
          %1311 = vmatpush1.msra.mxu0 0.0
          %1312 = vmatprep.mubr.f32.mxu0 0.0
          %1313 = vmatmul.mubr.f32.gmra.mrb[0].mxu0 %v1209
          %v1314 = vpop.f32.mrb[0].mxu0
          %v1315 = vadd.f32 %v1246, %v1314
          %v1316 = vpop.f32.mrb[0].mxu0
          %1317 = vmatprep.mubr.f32.mxu0 0.0
          %1318 = vmatmul.mubr.f32.gmra.mrb[0].mxu0 %v1210
          %v1319 = vpop.f32.mrb[0].mxu0
          %v1320 = vadd.f32 %v1246, %v1319
          %v1321 = vpop.f32.mrb[0].mxu0
          %1322 = vmatprep.mubr.f32.mxu0 0.0
          %1323 = vmatmul.mubr.f32.gmra.mrb[0].mxu0 %v1211
          %v1324 = vpop.f32.mrb[0].mxu0
          %v1325 = vadd.f32 %v1246, %v1324
          %v1326 = vpop.f32.mrb[0].mxu0
          %1327 = vmatprep.mubr.f32.mxu0 0.0
          %1328 = vmatmul.mubr.f32.gmra.mrb[0].mxu0 %v1212
          %v1329 = vpop.f32.mrb[0].mxu0
          %v1330 = vadd.f32 %v1246, %v1329
          %v1331 = vpop.f32.mrb[0].mxu0
          %1332 = vmatprep.mubr.f32.mxu0 0.0
          %1333 = vmatmul.mubr.f32.gmra.mrb[0].mxu0 %v1213
          %v1334 = vpop.f32.mrb[0].mxu0
          %v1335 = vadd.f32 %v1246, %v1334
          %v1336 = vpop.f32.mrb[0].mxu0
          %1337 = vmatprep.mubr.f32.mxu0 0.0
          %1338 = vmatmul.mubr.f32.gmra.mrb[0].mxu0 %v1214
          %v1339 = vpop.f32.mrb[0].mxu0
          %v1340 = vadd.f32 %v1246, %v1339
          %v1341 = vpop.f32.mrb[0].mxu0
          %1342 = vmatprep.mubr.f32.mxu0 0.0
          %1343 = vmatmul.mubr.f32.gmra.mrb[0].mxu0 %v1215
          %v1344 = vpop.f32.mrb[0].mxu0
          %v1345 = vadd.f32 %v1246, %v1344
          %v1346 = vpop.f32.mrb[0].mxu0
          %1347 = vmatprep.mubr.f32.mxu0 0.0
          %1348 = vmatmul.mubr.f32.gmra.mrb[0].mxu0 %v1216
          %v1349 = vpop.f32.mrb[0].mxu0
          %v1350 = vadd.f32 %v1246, %v1349
          %v1351 = vpop.f32.mrb[0].mxu0
          %1352 = vmatprep.mubr.f32.mxu0 0.0
          %1353 = vmatmul.mubr.f32.gmra.mrb[0].mxu0 %v1217
          %v1354 = vpop.f32.mrb[0].mxu0
          %v1355 = vadd.f32 %v1246, %v1354
          %v1356 = vpop.f32.mrb[0].mxu0
          %1357 = vmatprep.mubr.f32.mxu0 0.0
          %1358 = vmatmul.mubr.f32.gmra.mrb[0].mxu0 %v1218
          %v1359 = vpop.f32.mrb[0].mxu0
          %v1360 = vadd.f32 %v1246, %v1359
          %v1361 = vpop.f32.mrb[0].mxu0
          %1362 = vmatprep.mubr.f32.mxu0 0.0
          %1363 = vmatmul.mubr.f32.gmra.mrb[0].mxu0 %v1219
          %v1364 = vpop.f32.mrb[0].mxu0
          %v1365 = vadd.f32 %v1246, %v1364
          %v1366 = vpop.f32.mrb[0].mxu0
          %1367 = vmatprep.mubr.f32.mxu0 0.0
          %1368 = vmatmul.mubr.f32.gmra.mrb[0].mxu0 %v1220
          %v1369 = vpop.f32.mrb[0].mxu0
          %v1370 = vadd.f32 %v1246, %v1369
          %v1371 = vpop.f32.mrb[0].mxu0
          %1372 = vmatprep.mubr.f32.mxu0 0.0
          %1373 = vmatmul.mubr.f32.gmra.mrb[0].mxu0 %v1221
          %v1374 = vpop.f32.mrb[0].mxu0
          %v1375 = vadd.f32 %v1246, %v1374
          %v1376 = vpop.f32.mrb[0].mxu0
          %1377 = vmatprep.mubr.f32.mxu0 0.0
          %1378 = vmatmul.mubr.f32.gmra.mrb[0].mxu0 %v1222
          %v1379 = vpop.f32.mrb[0].mxu0
          %v1380 = vadd.f32 %v1246, %v1379
          %v1381 = vpop.f32.mrb[0].mxu0
          %1382 = vmatprep.mubr.f32.mxu0 0.0
          %1383 = vmatmul.mubr.f32.gmra.mrb[0].mxu0 %v1223
          %v1384 = vpop.f32.mrb[0].mxu0
          %v1385 = vadd.f32 %v1246, %v1384
          %v1386 = vpop.f32.mrb[0].mxu0
          %1387 = vmatprep.mubr.f32.mxu0 0.0
          %1388 = vmatmul.mubr.f32.gmra.mrb[0].mxu0 %v1224
          %v1389 = vpop.f32.mrb[0].mxu0
          %v1390 = vadd.f32 %v1246, %v1389
          %v1391 = vpop.f32.mrb[0].mxu0
          %1392 = vdwg.mxu0
          %v1393 = vmax.f32 %v1315, 0.0
          %v1394 = vmax.f32 %v1320, 0.0
          %v1395 = vmax.f32 %v1325, 0.0
          %v1396 = vmax.f32 %v1330, 0.0
          %v1397 = vmax.f32 %v1335, 0.0
          %v1398 = vmax.f32 %v1340, 0.0
          %v1399 = vmax.f32 %v1345, 0.0
          %v1400 = vmax.f32 %v1350, 0.0
          %v1401 = vmax.f32 %v1355, 0.0
          %v1402 = vmax.f32 %v1360, 0.0
          %v1403 = vmax.f32 %v1365, 0.0
          %v1404 = vmax.f32 %v1370, 0.0
          %v1405 = vmax.f32 %v1375, 0.0
          %v1406 = vmax.f32 %v1380, 0.0
          %v1407 = vmax.f32 %v1385, 0.0
          %v1408 = vmax.f32 %v1390, 0.0
          %v1409 = vld [vmem:[%s7] sm:$0xff]
          %v1410 = vld [vmem:[%s7 + $0x8] sm:$0xff]
          %v1411 = vld [vmem:[%s7 + $0x10] sm:$0xff]
          %v1412 = vld [vmem:[%s7 + $0x18] sm:$0xff]
          %v1413 = vld [vmem:[%s7 + $0x20] sm:$0xff]
          %v1414 = vld [vmem:[%s7 + $0x28] sm:$0xff]
          %v1415 = vld [vmem:[%s7 + $0x30] sm:$0xff]
          %v1416 = vld [vmem:[%s7 + $0x38] sm:$0xff]
          %v1417 = vld [vmem:[%s8] sm:$0x1]
          %v1419 = vlaneseq
          %v1420 = vshrl.u32 %v1419, 7
          %v1421 = vsub.s32 0, %v1420
          %v1422 = vrot.slane %v1417, %v1421
          %vm1424 = vcmask 523264
          %v1426 = vsel %vm1424, %v1393, 0
          %v1429 = vsel %vm1424, %v1394, 0
          %v1432 = vsel %vm1424, %v1395, 0
          %v1435 = vsel %vm1424, %v1396, 0
          %v1438 = vsel %vm1424, %v1397, 0
          %v1441 = vsel %vm1424, %v1398, 0
          %v1444 = vsel %vm1424, %v1399, 0
          %v1447 = vsel %vm1424, %v1400, 0
          %v1450 = vsel %vm1424, %v1401, 0
          %v1453 = vsel %vm1424, %v1402, 0
          %v1456 = vsel %vm1424, %v1403, 0
          %v1459 = vsel %vm1424, %v1404, 0
          %v1462 = vsel %vm1424, %v1405, 0
          %v1465 = vsel %vm1424, %v1406, 0
          %v1468 = vsel %vm1424, %v1407, 0
          %v1471 = vsel %vm1424, %v1408, 0
          %1473 = vmatprep.subr.mxu0 0.0
          %1474 = vmatpush1.msra.mxu0 %v1409
          %1475 = vmatprep.subr.mxu0 0.0
          %1476 = vmatpush1.msra.mxu0 %v1410
          %1477 = vmatprep.subr.mxu0 0.0
          %1478 = vmatpush1.msra.mxu0 %v1411
          %1479 = vmatprep.subr.mxu0 0.0
          %1480 = vmatpush1.msra.mxu0 %v1412
          %1481 = vmatprep.subr.mxu0 0.0
          %1482 = vmatpush1.msra.mxu0 %v1413
          %1483 = vmatprep.subr.mxu0 0.0
          %1484 = vmatpush1.msra.mxu0 %v1414
          %1485 = vmatprep.subr.mxu0 0.0
          %1486 = vmatpush1.msra.mxu0 %v1415
          %1487 = vmatprep.subr.mxu0 0.0
          %1488 = vmatpush1.msra.mxu0 %v1416
          %1489 = vmatprep.subr.mxu0 0.0
          %1490 = vmatpush1.msra.mxu0 0.0
          %1491 = vmatprep.subr.mxu0 0.0
          %1492 = vmatpush1.msra.mxu0 0.0
          %1493 = vmatprep.subr.mxu0 0.0
          %1494 = vmatpush1.msra.mxu0 0.0
          %1495 = vmatprep.subr.mxu0 0.0
          %1496 = vmatpush1.msra.mxu0 0.0
          %1497 = vmatprep.subr.mxu0 0.0
          %1498 = vmatpush1.msra.mxu0 0.0
          %1499 = vmatprep.subr.mxu0 0.0
          %1500 = vmatpush1.msra.mxu0 0.0
          %1501 = vmatprep.subr.mxu0 0.0
          %1502 = vmatpush1.msra.mxu0 0.0
          %1503 = vmatprep.subr.mxu0 0.0
          %1504 = vmatpush1.msra.mxu0 0.0
          %1505 = vmatprep.subr.mxu0 0.0
          %1506 = vmatpush1.msra.mxu0 0.0
          %1507 = vmatprep.subr.mxu0 0.0
          %1508 = vmatpush1.msra.mxu0 0.0
          %1509 = vmatprep.subr.mxu0 0.0
          %1510 = vmatpush1.msra.mxu0 0.0
          %1511 = vmatprep.subr.mxu0 0.0
          %1512 = vmatpush1.msra.mxu0 0.0
          %1513 = vmatprep.subr.mxu0 0.0
          %1514 = vmatpush1.msra.mxu0 0.0
          %1515 = vmatprep.subr.mxu0 0.0
          %1516 = vmatpush1.msra.mxu0 0.0
          %1517 = vmatprep.subr.mxu0 0.0
          %1518 = vmatpush1.msra.mxu0 0.0
          %1519 = vmatprep.subr.mxu0 0.0
          %1520 = vmatpush1.msra.mxu0 0.0
          %1521 = vmatprep.subr.mxu0 0.0
          %1522 = vmatpush1.msra.mxu0 0.0
          %1523 = vmatprep.subr.mxu0 0.0
          %1524 = vmatpush1.msra.mxu0 0.0
          %1525 = vmatprep.subr.mxu0 0.0
          %1526 = vmatpush1.msra.mxu0 0.0
          %1527 = vmatprep.subr.mxu0 0.0
          %1528 = vmatpush1.msra.mxu0 0.0
          %1529 = vmatprep.subr.mxu0 0.0
          %1530 = vmatpush1.msra.mxu0 0.0
          %1531 = vmatprep.subr.mxu0 0.0
          %1532 = vmatpush1.msra.mxu0 0.0
          %1533 = vmatprep.subr.mxu0 0.0
          %1534 = vmatpush1.msra.mxu0 0.0
          %1535 = vmatprep.subr.mxu0 0.0
          %1536 = vmatpush1.msra.mxu0 0.0
          %1537 = vmatprep.mubr.f32.mxu0 0.0
          %1538 = vmatmul.mubr.f32.gmra.mrb[0].mxu0 %v1426
          %v1539 = vpop.f32.mrb[0].mxu0
          %v1540 = vadd.f32 %v1422, %v1539
          %v1541 = vpop.f32.mrb[0].mxu0
          %1542 = vmatprep.mubr.f32.mxu0 0.0
          %1543 = vmatmul.mubr.f32.gmra.mrb[0].mxu0 %v1429
          %v1544 = vpop.f32.mrb[0].mxu0
          %v1545 = vadd.f32 %v1422, %v1544
          %v1546 = vpop.f32.mrb[0].mxu0
          %1547 = vmatprep.mubr.f32.mxu0 0.0
          %1548 = vmatmul.mubr.f32.gmra.mrb[0].mxu0 %v1432
          %v1549 = vpop.f32.mrb[0].mxu0
          %v1550 = vadd.f32 %v1422, %v1549
          %v1551 = vpop.f32.mrb[0].mxu0
          %1552 = vmatprep.mubr.f32.mxu0 0.0
          %1553 = vmatmul.mubr.f32.gmra.mrb[0].mxu0 %v1435
          %v1554 = vpop.f32.mrb[0].mxu0
          %v1555 = vadd.f32 %v1422, %v1554
          %v1556 = vpop.f32.mrb[0].mxu0
          %1557 = vmatprep.mubr.f32.mxu0 0.0
          %1558 = vmatmul.mubr.f32.gmra.mrb[0].mxu0 %v1438
          %v1559 = vpop.f32.mrb[0].mxu0
          %v1560 = vadd.f32 %v1422, %v1559
          %v1561 = vpop.f32.mrb[0].mxu0
          %1562 = vmatprep.mubr.f32.mxu0 0.0
          %1563 = vmatmul.mubr.f32.gmra.mrb[0].mxu0 %v1441
          %v1564 = vpop.f32.mrb[0].mxu0
          %v1565 = vadd.f32 %v1422, %v1564
          %v1566 = vpop.f32.mrb[0].mxu0
          %1567 = vmatprep.mubr.f32.mxu0 0.0
          %1568 = vmatmul.mubr.f32.gmra.mrb[0].mxu0 %v1444
          %v1569 = vpop.f32.mrb[0].mxu0
          %v1570 = vadd.f32 %v1422, %v1569
          %v1571 = vpop.f32.mrb[0].mxu0
          %1572 = vmatprep.mubr.f32.mxu0 0.0
          %1573 = vmatmul.mubr.f32.gmra.mrb[0].mxu0 %v1447
          %v1574 = vpop.f32.mrb[0].mxu0
          %v1575 = vadd.f32 %v1422, %v1574
          %v1576 = vpop.f32.mrb[0].mxu0
          %1577 = vmatprep.mubr.f32.mxu0 0.0
          %1578 = vmatmul.mubr.f32.gmra.mrb[0].mxu0 %v1450
          %v1579 = vpop.f32.mrb[0].mxu0
          %v1580 = vadd.f32 %v1422, %v1579
          %v1581 = vpop.f32.mrb[0].mxu0
          %1582 = vmatprep.mubr.f32.mxu0 0.0
          %1583 = vmatmul.mubr.f32.gmra.mrb[0].mxu0 %v1453
          %v1584 = vpop.f32.mrb[0].mxu0
          %v1585 = vadd.f32 %v1422, %v1584
          %v1586 = vpop.f32.mrb[0].mxu0
          %1587 = vmatprep.mubr.f32.mxu0 0.0
          %1588 = vmatmul.mubr.f32.gmra.mrb[0].mxu0 %v1456
          %v1589 = vpop.f32.mrb[0].mxu0
          %v1590 = vadd.f32 %v1422, %v1589
          %v1591 = vpop.f32.mrb[0].mxu0
          %1592 = vmatprep.mubr.f32.mxu0 0.0
          %1593 = vmatmul.mubr.f32.gmra.mrb[0].mxu0 %v1459
          %v1594 = vpop.f32.mrb[0].mxu0
          %v1595 = vadd.f32 %v1422, %v1594
          %v1596 = vpop.f32.mrb[0].mxu0
          %1597 = vmatprep.mubr.f32.mxu0 0.0
          %1598 = vmatmul.mubr.f32.gmra.mrb[0].mxu0 %v1462
          %v1599 = vpop.f32.mrb[0].mxu0
          %v1600 = vadd.f32 %v1422, %v1599
          %v1601 = vpop.f32.mrb[0].mxu0
          %1602 = vmatprep.mubr.f32.mxu0 0.0
          %1603 = vmatmul.mubr.f32.gmra.mrb[0].mxu0 %v1465
          %v1604 = vpop.f32.mrb[0].mxu0
          %v1605 = vadd.f32 %v1422, %v1604
          %v1606 = vpop.f32.mrb[0].mxu0
          %1607 = vmatprep.mubr.f32.mxu0 0.0
          %1608 = vmatmul.mubr.f32.gmra.mrb[0].mxu0 %v1468
          %v1609 = vpop.f32.mrb[0].mxu0
          %v1610 = vadd.f32 %v1422, %v1609
          %v1611 = vpop.f32.mrb[0].mxu0
          %1612 = vmatprep.mubr.f32.mxu0 0.0
          %1613 = vmatmul.mubr.f32.gmra.mrb[0].mxu0 %v1471
          %v1614 = vpop.f32.mrb[0].mxu0
          %v1615 = vadd.f32 %v1422, %v1614
          %v1616 = vpop.f32.mrb[0].mxu0
          %1617 = vdwg.mxu0
          %v1618 = vmax.f32 %v1540, 0.0
          %v1619 = vmax.f32 %v1545, 0.0
          %v1620 = vmax.f32 %v1550, 0.0
          %v1621 = vmax.f32 %v1555, 0.0
          %v1622 = vmax.f32 %v1560, 0.0
          %v1623 = vmax.f32 %v1565, 0.0
          %v1624 = vmax.f32 %v1570, 0.0
          %v1625 = vmax.f32 %v1575, 0.0
          %v1626 = vmax.f32 %v1580, 0.0
          %v1627 = vmax.f32 %v1585, 0.0
          %v1628 = vmax.f32 %v1590, 0.0
          %v1629 = vmax.f32 %v1595, 0.0
          %v1630 = vmax.f32 %v1600, 0.0
          %v1631 = vmax.f32 %v1605, 0.0
          %v1632 = vmax.f32 %v1610, 0.0
          %v1633 = vmax.f32 %v1615, 0.0
          %v1634 = vld [vmem:[#allocation7] sm:$0xff]
          %v1635 = vld [vmem:[#allocation7 + $0x8] sm:$0xff]
          %v1636 = vld [vmem:[#allocation7 + $0x10] sm:$0xff]
          %v1637 = vld [vmem:[#allocation7 + $0x18] sm:$0xff]
          %v1638 = vld [vmem:[%s10] sm:$0x1]
          %v1640 = vlaneseq
          %v1641 = vshrl.u32 %v1640, 7
          %v1642 = vsub.s32 0, %v1641
          %v1643 = vrot.slane %v1638, %v1642
          %vm1645 = vcmask 261120
          %v1647 = vsel %vm1645, %v1618, 0
          %v1650 = vsel %vm1645, %v1619, 0
          %v1653 = vsel %vm1645, %v1620, 0
          %v1656 = vsel %vm1645, %v1621, 0
          %v1659 = vsel %vm1645, %v1622, 0
          %v1662 = vsel %vm1645, %v1623, 0
          %v1665 = vsel %vm1645, %v1624, 0
          %v1668 = vsel %vm1645, %v1625, 0
          %v1671 = vsel %vm1645, %v1626, 0
          %v1674 = vsel %vm1645, %v1627, 0
          %v1677 = vsel %vm1645, %v1628, 0
          %v1680 = vsel %vm1645, %v1629, 0
          %v1683 = vsel %vm1645, %v1630, 0
          %v1686 = vsel %vm1645, %v1631, 0
          %v1689 = vsel %vm1645, %v1632, 0
          %v1692 = vsel %vm1645, %v1633, 0
          %1694 = vmatprep.subr.mxu0 0.0
          %1695 = vmatpush1.msra.mxu0 %v1634
          %1696 = vmatprep.subr.mxu0 0.0
          %1697 = vmatpush1.msra.mxu0 %v1635
          %1698 = vmatprep.subr.mxu0 0.0
          %1699 = vmatpush1.msra.mxu0 %v1636
          %1700 = vmatprep.subr.mxu0 0.0
          %1701 = vmatpush1.msra.mxu0 %v1637
          %1702 = vmatprep.subr.mxu0 0.0
          %1703 = vmatpush1.msra.mxu0 0.0
          %1704 = vmatprep.subr.mxu0 0.0
          %1705 = vmatpush1.msra.mxu0 0.0
          %1706 = vmatprep.subr.mxu0 0.0
          %1707 = vmatpush1.msra.mxu0 0.0
          %1708 = vmatprep.subr.mxu0 0.0
          %1709 = vmatpush1.msra.mxu0 0.0
          %1710 = vmatprep.subr.mxu0 0.0
          %1711 = vmatpush1.msra.mxu0 0.0
          %1712 = vmatprep.subr.mxu0 0.0
          %1713 = vmatpush1.msra.mxu0 0.0
          %1714 = vmatprep.subr.mxu0 0.0
          %1715 = vmatpush1.msra.mxu0 0.0
          %1716 = vmatprep.subr.mxu0 0.0
          %1717 = vmatpush1.msra.mxu0 0.0
          %1718 = vmatprep.subr.mxu0 0.0
          %1719 = vmatpush1.msra.mxu0 0.0
          %1720 = vmatprep.subr.mxu0 0.0
          %1721 = vmatpush1.msra.mxu0 0.0
          %1722 = vmatprep.subr.mxu0 0.0
          %1723 = vmatpush1.msra.mxu0 0.0
          %1724 = vmatprep.subr.mxu0 0.0
          %1725 = vmatpush1.msra.mxu0 0.0
          %1726 = vmatprep.subr.mxu0 0.0
          %1727 = vmatpush1.msra.mxu0 0.0
          %1728 = vmatprep.subr.mxu0 0.0
          %1729 = vmatpush1.msra.mxu0 0.0
          %1730 = vmatprep.subr.mxu0 0.0
          %1731 = vmatpush1.msra.mxu0 0.0
          %1732 = vmatprep.subr.mxu0 0.0
          %1733 = vmatpush1.msra.mxu0 0.0
          %1734 = vmatprep.subr.mxu0 0.0
          %1735 = vmatpush1.msra.mxu0 0.0
          %1736 = vmatprep.subr.mxu0 0.0
          %1737 = vmatpush1.msra.mxu0 0.0
          %1738 = vmatprep.subr.mxu0 0.0
          %1739 = vmatpush1.msra.mxu0 0.0
          %1740 = vmatprep.subr.mxu0 0.0
          %1741 = vmatpush1.msra.mxu0 0.0
          %1742 = vmatprep.subr.mxu0 0.0
          %1743 = vmatpush1.msra.mxu0 0.0
          %1744 = vmatprep.subr.mxu0 0.0
          %1745 = vmatpush1.msra.mxu0 0.0
          %1746 = vmatprep.subr.mxu0 0.0
          %1747 = vmatpush1.msra.mxu0 0.0
          %1748 = vmatprep.subr.mxu0 0.0
          %1749 = vmatpush1.msra.mxu0 0.0
          %1750 = vmatprep.subr.mxu0 0.0
          %1751 = vmatpush1.msra.mxu0 0.0
          %1752 = vmatprep.subr.mxu0 0.0
          %1753 = vmatpush1.msra.mxu0 0.0
          %1754 = vmatprep.subr.mxu0 0.0
          %1755 = vmatpush1.msra.mxu0 0.0
          %1756 = vmatprep.subr.mxu0 0.0
          %1757 = vmatpush1.msra.mxu0 0.0
          %1758 = vmatprep.mubr.f32.mxu0 0.0
          %1759 = vmatmul.mubr.f32.gmra.mrb[0].mxu0 %v1647
          %v1760 = vpop.f32.mrb[0].mxu0
          %v1761 = vadd.f32 %v1643, %v1760
          %v1762 = vpop.f32.mrb[0].mxu0
          %1763 = vmatprep.mubr.f32.mxu0 0.0
          %1764 = vmatmul.mubr.f32.gmra.mrb[0].mxu0 %v1650
          %v1765 = vpop.f32.mrb[0].mxu0
          %v1766 = vadd.f32 %v1643, %v1765
          %v1767 = vpop.f32.mrb[0].mxu0
          %1768 = vmatprep.mubr.f32.mxu0 0.0
          %1769 = vmatmul.mubr.f32.gmra.mrb[0].mxu0 %v1653
          %v1770 = vpop.f32.mrb[0].mxu0
          %v1771 = vadd.f32 %v1643, %v1770
          %v1772 = vpop.f32.mrb[0].mxu0
          %1773 = vmatprep.mubr.f32.mxu0 0.0
          %1774 = vmatmul.mubr.f32.gmra.mrb[0].mxu0 %v1656
          %v1775 = vpop.f32.mrb[0].mxu0
          %v1776 = vadd.f32 %v1643, %v1775
          %v1777 = vpop.f32.mrb[0].mxu0
          %1778 = vmatprep.mubr.f32.mxu0 0.0
          %1779 = vmatmul.mubr.f32.gmra.mrb[0].mxu0 %v1659
          %v1780 = vpop.f32.mrb[0].mxu0
          %v1781 = vadd.f32 %v1643, %v1780
          %v1782 = vpop.f32.mrb[0].mxu0
          %1783 = vmatprep.mubr.f32.mxu0 0.0
          %1784 = vmatmul.mubr.f32.gmra.mrb[0].mxu0 %v1662
          %v1785 = vpop.f32.mrb[0].mxu0
          %v1786 = vadd.f32 %v1643, %v1785
          %v1787 = vpop.f32.mrb[0].mxu0
          %1788 = vmatprep.mubr.f32.mxu0 0.0
          %1789 = vmatmul.mubr.f32.gmra.mrb[0].mxu0 %v1665
          %v1790 = vpop.f32.mrb[0].mxu0
          %v1791 = vadd.f32 %v1643, %v1790
          %v1792 = vpop.f32.mrb[0].mxu0
          %1793 = vmatprep.mubr.f32.mxu0 0.0
          %1794 = vmatmul.mubr.f32.gmra.mrb[0].mxu0 %v1668
          %v1795 = vpop.f32.mrb[0].mxu0
          %v1796 = vadd.f32 %v1643, %v1795
          %v1797 = vpop.f32.mrb[0].mxu0
          %1798 = vmatprep.mubr.f32.mxu0 0.0
          %1799 = vmatmul.mubr.f32.gmra.mrb[0].mxu0 %v1671
          %v1800 = vpop.f32.mrb[0].mxu0
          %v1801 = vadd.f32 %v1643, %v1800
          %v1802 = vpop.f32.mrb[0].mxu0
          %1803 = vmatprep.mubr.f32.mxu0 0.0
          %1804 = vmatmul.mubr.f32.gmra.mrb[0].mxu0 %v1674
          %v1805 = vpop.f32.mrb[0].mxu0
          %v1806 = vadd.f32 %v1643, %v1805
          %v1807 = vpop.f32.mrb[0].mxu0
          %1808 = vmatprep.mubr.f32.mxu0 0.0
          %1809 = vmatmul.mubr.f32.gmra.mrb[0].mxu0 %v1677
          %v1810 = vpop.f32.mrb[0].mxu0
          %v1811 = vadd.f32 %v1643, %v1810
          %v1812 = vpop.f32.mrb[0].mxu0
          %1813 = vmatprep.mubr.f32.mxu0 0.0
          %1814 = vmatmul.mubr.f32.gmra.mrb[0].mxu0 %v1680
          %v1815 = vpop.f32.mrb[0].mxu0
          %v1816 = vadd.f32 %v1643, %v1815
          %v1817 = vpop.f32.mrb[0].mxu0
          %1818 = vmatprep.mubr.f32.mxu0 0.0
          %1819 = vmatmul.mubr.f32.gmra.mrb[0].mxu0 %v1683
          %v1820 = vpop.f32.mrb[0].mxu0
          %v1821 = vadd.f32 %v1643, %v1820
          %v1822 = vpop.f32.mrb[0].mxu0
          %1823 = vmatprep.mubr.f32.mxu0 0.0
          %1824 = vmatmul.mubr.f32.gmra.mrb[0].mxu0 %v1686
          %v1825 = vpop.f32.mrb[0].mxu0
          %v1826 = vadd.f32 %v1643, %v1825
          %v1827 = vpop.f32.mrb[0].mxu0
          %1828 = vmatprep.mubr.f32.mxu0 0.0
          %1829 = vmatmul.mubr.f32.gmra.mrb[0].mxu0 %v1689
          %v1830 = vpop.f32.mrb[0].mxu0
          %v1831 = vadd.f32 %v1643, %v1830
          %v1832 = vpop.f32.mrb[0].mxu0
          %1833 = vmatprep.mubr.f32.mxu0 0.0
          %1834 = vmatmul.mubr.f32.gmra.mrb[0].mxu0 %v1692
          %v1835 = vpop.f32.mrb[0].mxu0
          %v1836 = vadd.f32 %v1643, %v1835
          %v1837 = vpop.f32.mrb[0].mxu0
          %1838 = vdwg.mxu0
          %1839 = vst [vmem:[%s567] sm:$0xff] %v1761
          %1840 = vst [vmem:[%s567 + $0x8] sm:$0xff] %v1766
          %1841 = vst [vmem:[%s567 + $0x10] sm:$0xff] %v1771
          %1842 = vst [vmem:[%s567 + $0x18] sm:$0xff] %v1776
          %1843 = vst [vmem:[%s567 + $0x20] sm:$0xff] %v1781
          %1844 = vst [vmem:[%s567 + $0x28] sm:$0xff] %v1786
          %1845 = vst [vmem:[%s567 + $0x30] sm:$0xff] %v1791
          %1846 = vst [vmem:[%s567 + $0x38] sm:$0xff] %v1796
          %1847 = vst [vmem:[%s567 + $0x40] sm:$0xff] %v1801
          %1848 = vst [vmem:[%s567 + $0x48] sm:$0xff] %v1806
          %1849 = vst [vmem:[%s567 + $0x50] sm:$0xff] %v1811
          %1850 = vst [vmem:[%s567 + $0x58] sm:$0xff] %v1816
          %1851 = vst [vmem:[%s567 + $0x60] sm:$0xff] %v1821
          %1852 = vst [vmem:[%s567 + $0x68] sm:$0xff] %v1826
          %1853 = vst [vmem:[%s567 + $0x70] sm:$0xff] %v1831
          %1854 = vst [vmem:[%s567 + $0x78] sm:$0xff] %v1836
        $region118: #{tpu_custom_call.1} parent=97 // pred_fallthru
          _
        %s1855 = sand.u32 %s297, 1
        %s1856 = scalar_lea.sflag [#allocation6], %s1855
        %s1857 = sand.u32 %s297, 1
        %s1858 = smul.addr %s1857, 128
        %s1859 = scalar_lea.vmem [#allocation9], %s1858
        // Predicated region
        $region119: #{tpu_custom_call.1} parent=97 // pred_check
          %p1860 = pneg %p307
        $region120: #{tpu_custom_call.1} parent=97 // pred_check_branch
          %1862 = sbr.rel (%p1860) target = $region122
        $region121: #{tpu_custom_call.1} parent=97 // pred_region
          %s1863 = smul.u32 16, %s33
          %s1865 = ssub.s32 2048, 2048
          %1866 = vsyncadd %s1856, %s1865
          %s1867 = smul.addr %s1863, 128
          %s1868 = scalar_lea.hbm %s11, %s1867
          %s1869 = sshll.u32 %s1859, 4
          %s1870 = int_to_ptr.vmem [resolvable:$true] %s1869
          %1875 = dma.vmem_to_hbm [thread:$0]  %s1870, 2048, %s1868, %s1856, 128, 128, 8
        $region122: #{tpu_custom_call.1} parent=97 // pred_fallthru
          _
      $region98: #{tpu_custom_call.1} parent=5 // pred_fallthru
        _
      %p1876 = scmp.le.s32.totalorder 2, %s24
      // Predicated region
      $region123: #{tpu_custom_call.1} parent=5 // pred_check
        %p1877 = pneg %p1876
      $region124: #{tpu_custom_call.1} parent=5 // pred_check_branch
        %1879 = sbr.rel (%p1877) target = $region126
      $region125: #{tpu_custom_call.1} parent=5 // pred_region
        %s1880 = ssub.s32 %s24, 2
        // Predicated region
        $region127: #{tpu_custom_call.1} parent=125 // pred_check
          %p1881 = pneg %p313
        $region128: #{tpu_custom_call.1} parent=125 // pred_check_branch
          %1883 = sbr.rel (%p1881) target = $region130
        $region129: #{tpu_custom_call.1} parent=125 // pred_region
          %s1884 = sand.u32 %s298, 1
          %s1885 = scalar_lea.sflag [#allocation6], %s1884
          %s1886 = sand.u32 %s298, 1
          %s1887 = smul.addr %s1886, 128
          %s1888 = scalar_lea.vmem [#allocation9], %s1887
          %1889 = dma.done %s1885, 2048
        $region130: #{tpu_custom_call.1} parent=125 // pred_fallthru
          _
      $region126: #{tpu_custom_call.1} parent=5 // pred_fallthru
        _
    $region6: #{tpu_custom_call.1} parent=1 // loop_footer
      %s28 = sadd.s32 1, %s24
    $region7: #{tpu_custom_call.1} parent=1 // loop_footer_branch
      %23 = sbr.rel target = $region3
    $region8: #{tpu_custom_call.1} parent=1 // loop_exit
      _
    %1890 = vsyncpa [#allocation5], 1
    %s1891 = scalar_lea.sflag [#allocation5], 1
    %1892 = vsyncpa %s1891, 1
    %1893 = vsyncpa [#allocation8], 1
    %1894 = vsyncpa [#allocation6], 1
    %s1895 = scalar_lea.sflag [#allocation6], 1
    %1896 = vsyncpa %s1895, 1

</llo_original>
